<compile_context>
chip_gen: v7x
topology: tpu7x:2x2x1
jax: 0.10.0
libtpu: 0.0.40
codegen_flags: <defaults>
</compile_context>

<pallas_src>
import functools

import jax
import jax.numpy as jnp
from jax.experimental import pallas as pl
from jax.experimental.pallas import tpu as pltpu


def _round_up(x, m):
    return ((x + m - 1) // m) * m


# ---------------------------------------------------------------------------
# Kernel A: layer-1 aggregation + tanh + layer-2 projection.
#   Z_scaled = Dinv * ( tanh( Dinv * ((A+I) @ (Dinv*X)) @ W1 + b1 ) @ W2 )
# grid = (row blocks, reduction blocks); reduction last; row axis "parallel".
# X is VMEM-resident (constant index_map); adjacency streams as int8 tiles.
# ---------------------------------------------------------------------------
def conv1_project_kernel(block, adj_ref, x_ref, dinv_ref, w1_ref, b1_ref,
                         w2_ref, z_ref, acc_ref):
    k = pl.program_id(1)
    nk = pl.num_programs(1)

    @pl.when(k == 0)
    def _():
        acc_ref[...] = jnp.zeros_like(acc_ref)

    start = pl.multiple_of(k * block, block)
    x_blk = x_ref[pl.ds(start, block), :]                       # (block, F) bf16
    acc_ref[...] += jnp.dot(adj_ref[...].astype(jnp.bfloat16), x_blk,
                            preferred_element_type=jnp.float32)

    @pl.when(k == nk - 1)
    def _():
        agg = dinv_ref[...] * acc_ref[...]                      # (block, F) f32
        h1 = jnp.tanh(jnp.dot(agg, w1_ref[...],
                              preferred_element_type=jnp.float32) + b1_ref[...])
        z = jnp.dot(h1, w2_ref[...], preferred_element_type=jnp.float32)
        # Pre-scale by D^-1/2 here so kernel B's aggregation consumes Z directly.
        z_ref[...] = (dinv_ref[...] * z).astype(z_ref.dtype)    # (block, C_pad) bf16


# ---------------------------------------------------------------------------
# Kernel B: layer-2 aggregation + bias + tanh + per-row-block partial pooling.
#   partial[i] = P[:, i-block] @ tanh( Dinv * ((A+I) @ Z_scaled) + b2 )
# Row axis "parallel" (per-row-block partials, summed + sigmoid'ed in JAX).
# ---------------------------------------------------------------------------
def conv2_pool_kernel(block, adj_ref, z_ref, dinv_ref, b2_ref, pool_ref,
                      out_ref, acc_ref):
    k = pl.program_id(1)
    nk = pl.num_programs(1)

    @pl.when(k == 0)
    def _():
        acc_ref[...] = jnp.zeros_like(acc_ref)

    start = pl.multiple_of(k * block, block)
    z_blk = z_ref[pl.ds(start, block), :]                       # (block, C_pad) bf16
    acc_ref[...] += jnp.dot(adj_ref[...].astype(jnp.bfloat16), z_blk,
                            preferred_element_type=jnp.float32)

    @pl.when(k == nk - 1)
    def _():
        h2 = jnp.tanh(dinv_ref[...] * acc_ref[...] + b2_ref[...])   # (block, C_pad)
        out_ref[...] = jnp.dot(pool_ref[...], h2,
                               preferred_element_type=jnp.float32)  # (B, C_pad)


# ---------------------------------------------------------------------------
# Fused forward: prep (one N^2 scatter) + two pallas_calls + tiny JAX epilogue.
# ---------------------------------------------------------------------------
@functools.partial(jax.jit, static_argnums=(7,))
def _gcn_forward_impl(x, edge_index, batch_index, w1, b1, w2, b2, num_graphs):
    n, f = x.shape
    e = w1.shape[1]
    c = w2.shape[1]
    c_pad = _round_up(c, 128)
    vmem_limit = 32 * 1024 * 1024

    # Lane-alignment padding floor is 128; block size adapts independently.
    n_pad = _round_up(n, 128)
    block = max(b for b in (128, 256, 512) if n_pad % b == 0)
    gm = n_pad // block
    gk = n_pad // block

    idx = jnp.arange(n, dtype=edge_index.dtype)
    # Single scatter builds the padded int8 (A + I); duplicates / explicit
    # self-loops are harmless with .set (entries stay 1).
    rows = jnp.concatenate([edge_index[1], idx])
    cols = jnp.concatenate([edge_index[0], idx])
    adj_i8 = jnp.zeros((n_pad, n_pad), jnp.int8).at[rows, cols].set(1)

    deg = jnp.sum(adj_i8, axis=1, dtype=jnp.int32).astype(jnp.float32)[:, None]
    dinv = jnp.where(deg > 0, jax.lax.rsqrt(jnp.maximum(deg, 1.0)), 0.0)  # (n_pad,1)

    # Pre-scaled node features (bf16 MXU operand); padded rows are zero.
    x_scaled = jnp.zeros((n_pad, f), jnp.bfloat16).at[:n].set(
        (dinv[:n] * x).astype(jnp.bfloat16))

    # Mean-pool matrix, padded columns zero -> padded nodes are inert.
    onehot = (batch_index[None, :] == jnp.arange(num_graphs)[:, None]
              ).astype(jnp.float32)
    counts = jnp.maximum(onehot.sum(axis=1, keepdims=True), 1.0)
    pool = jnp.zeros((num_graphs, n_pad), jnp.float32).at[:, :n].set(onehot / counts)

    b1_f = b1.reshape(1, e).astype(jnp.float32)
    w1_f = w1.astype(jnp.float32)
    # Lane-dense class dim: pad C to 128 for W2 / b2 / Z / partial pools.
    w2_p = jnp.zeros((e, c_pad), jnp.float32).at[:, :c].set(w2)
    b2_p = jnp.zeros((1, c_pad), jnp.float32).at[:, :c].set(b2.reshape(1, c))

    # ---- Kernel A: Z_scaled (n_pad, c_pad) bf16 ----
    z_scaled = pl.pallas_call(
        functools.partial(conv1_project_kernel, block),
        out_shape=jax.ShapeDtypeStruct((n_pad, c_pad), jnp.bfloat16),
        grid_spec=pltpu.PrefetchScalarGridSpec(
            num_scalar_prefetch=0,
            grid=(gm, gk),
            in_specs=[
                pl.BlockSpec((block, block), lambda i, k: (i, k)),   # A+I (int8)
                pl.BlockSpec((n_pad, f), lambda i, k: (0, 0)),       # X (resident)
                pl.BlockSpec((block, 1), lambda i, k: (i, 0)),       # D^-1/2 rows
                pl.BlockSpec((f, e), lambda i, k: (0, 0)),           # W1
                pl.BlockSpec((1, e), lambda i, k: (0, 0)),           # b1
                pl.BlockSpec((e, c_pad), lambda i, k: (0, 0)),       # W2 (padded)
            ],
            out_specs=pl.BlockSpec((block, c_pad), lambda i, k: (i, 0)),
            scratch_shapes=[pltpu.VMEM((block, f), jnp.float32)],
        ),
        compiler_params=pltpu.CompilerParams(
            dimension_semantics=("parallel", "arbitrary"),
            vmem_limit_bytes=vmem_limit),
    )(adj_i8, x_scaled, dinv, w1_f, b1_f, w2_p)

    # ---- Kernel B: per-row-block partial pools (gm, B, c_pad) f32 ----
    partials = pl.pallas_call(
        functools.partial(conv2_pool_kernel, block),
        out_shape=jax.ShapeDtypeStruct((gm, num_graphs, c_pad), jnp.float32),
        grid_spec=pltpu.PrefetchScalarGridSpec(
            num_scalar_prefetch=0,
            grid=(gm, gk),
            in_specs=[
                pl.BlockSpec((block, block), lambda i, k: (i, k)),   # A+I (int8)
                pl.BlockSpec((n_pad, c_pad), lambda i, k: (0, 0)),   # Z (resident)
                pl.BlockSpec((block, 1), lambda i, k: (i, 0)),       # D^-1/2 rows
                pl.BlockSpec((1, c_pad), lambda i, k: (0, 0)),       # b2 (padded)
                pl.BlockSpec((num_graphs, block), lambda i, k: (0, i)),  # pool cols
            ],
            out_specs=pl.BlockSpec((None, num_graphs, c_pad),
                                   lambda i, k: (i, 0, 0)),
            scratch_shapes=[pltpu.VMEM((block, c_pad), jnp.float32)],
        ),
        compiler_params=pltpu.CompilerParams(
            dimension_semantics=("parallel", "arbitrary"),
            vmem_limit_bytes=vmem_limit),
    )(adj_i8, z_scaled, dinv, b2_p, pool)

    # Tiny epilogue in plain JAX: sum partial pools, sigmoid, drop padded classes.
    return jax.nn.sigmoid(jnp.sum(partials, axis=0))[:, :c]


def gcn_forward_pallas(x, edge_index, batch_index, w1, b1, w2, b2, num_graphs):
    return _gcn_forward_impl(x, edge_index, batch_index, w1, b1, w2, b2,
                             num_graphs)


# ---------------------------------------------------------------------------
# Pure-JAX f32 reference (PyG GCNConv semantics).
# ---------------------------------------------------------------------------
def gcn_forward_ref(x, edge_index, batch_index, w1, b1, w2, b2, num_graphs):
    n = x.shape[0]
    src, dst = edge_index[0], edge_index[1]
    idx = jnp.arange(n)
    a = jnp.zeros((n, n), jnp.float32).at[dst, src].set(1.0)
    a = a.at[idx, idx].set(1.0)                      # A + I (deduped)
    deg = a.sum(axis=1)
    dinv = jnp.where(deg > 0, 1.0 / jnp.sqrt(deg), 0.0)
    a_hat = dinv[:, None] * a * dinv[None, :]
    h1 = jnp.tanh(a_hat @ (x @ w1) + b1.reshape(1, -1))
    h2 = jnp.tanh(a_hat @ (h1 @ w2) + b2.reshape(1, -1))
    onehot = (batch_index[None, :] == jnp.arange(num_graphs)[:, None]
              ).astype(jnp.float32)
    pool = onehot / jnp.maximum(onehot.sum(axis=1, keepdims=True), 1.0)
    return jax.nn.sigmoid(pool @ h2)


if __name__ == "__main__":
    # Small, deterministic problem: 2 graphs, 16 nodes total.
    num_nodes = 16
    num_features = 8
    embedding_size = 32
    num_classes = 4
    num_graphs = 2

    key = jax.random.PRNGKey(0)
    k_x, k_w1, k_w2 = jax.random.split(key, 3)

    # Node features [N, F]
    x = jax.random.normal(k_x, (num_nodes, num_features), dtype=jnp.float32)

    # Simple undirected ring graph over all 16 nodes (edges in both directions).
    src = jnp.arange(num_nodes, dtype=jnp.int32)
    dst = (src + 1) % num_nodes
    edge_index = jnp.stack(
        [jnp.concatenate([src, dst]), jnp.concatenate([dst, src])], axis=0
    )  # [2, 2N]

    # First 8 nodes -> graph 0, last 8 -> graph 1.
    batch_index = jnp.concatenate(
        [jnp.zeros(8, jnp.int32), jnp.ones(8, jnp.int32)]
    )

    # Deterministic parameter init (glorot-ish weights, zero biases, like PyG GCNConv).
    def glorot(k, shape):
        fan_in, fan_out = shape
        scale = jnp.sqrt(6.0 / (fan_in + fan_out))
        return jax.random.uniform(k, shape, jnp.float32, -scale, scale)

    w1 = glorot(k_w1, (num_features, embedding_size))
    b1 = jnp.zeros((1, embedding_size), jnp.float32)
    w2 = glorot(k_w2, (embedding_size, num_classes))
    b2 = jnp.zeros((1, num_classes), jnp.float32)

    out = gcn_forward_pallas(x, edge_index, batch_index, w1, b1, w2, b2,
                             num_graphs)
    out = jax.block_until_ready(out)

    ref = gcn_forward_ref(x, edge_index, batch_index, w1, b1, w2, b2,
                          num_graphs)
    assert out.shape == (num_graphs, num_classes)
    # bf16 MXU operands (scaled X, Z) with f32 accumulation; int8 adjacency is
    # exact. Compare against the f32 reference with a bf16-appropriate tolerance.
    assert jnp.allclose(out, ref, atol=2e-2, rtol=2e-2), (out, ref)

    print("KERNEL_OK")
</pallas_src>

<mosaic_0001>
module attributes {stable_mosaic.version = 11 : i64} {
  func.func @conv1_project_kernel(%arg0: i32, %arg1: i32, %arg2: memref<128x128xi8, #tpu.memory_space<vmem>>, %arg3: memref<128x8xbf16, #tpu.memory_space<vmem>>, %arg4: memref<128x1xf32, #tpu.memory_space<vmem>>, %arg5: memref<8x32xf32, #tpu.memory_space<vmem>>, %arg6: memref<1x32xf32, #tpu.memory_space<vmem>>, %arg7: memref<32x128xf32, #tpu.memory_space<vmem>>, %arg8: memref<128x128xbf16, #tpu.memory_space<vmem>>, %arg9: memref<128x8xf32, #tpu.memory_space<vmem>>) attributes {dimension_semantics = [#tpu.dimension_semantics<parallel>, #tpu.dimension_semantics<arbitrary>], iteration_bounds = array<i64: 1, 1>, scalar_prefetch = 0 : i64, scratch_operands = 1 : i64, tpu.core_type = #tpu.core_type<tc>, window_params = [{transform_indices = @transform_0, window_bounds = array<i64: 128, 128>}, {pipeline_mode = #tpu.pipeline_mode<synchronous>, transform_indices = @transform_1, window_bounds = array<i64: 128, 8>}, {transform_indices = @transform_2, window_bounds = array<i64: 128, 1>}, {pipeline_mode = #tpu.pipeline_mode<synchronous>, transform_indices = @transform_3, window_bounds = array<i64: 8, 32>}, {pipeline_mode = #tpu.pipeline_mode<synchronous>, transform_indices = @transform_4, window_bounds = array<i64: 1, 32>}, {pipeline_mode = #tpu.pipeline_mode<synchronous>, transform_indices = @transform_5, window_bounds = array<i64: 32, 128>}, {transform_indices = @transform_6, window_bounds = array<i64: 128, 128>}]} {
    %c0_i32 = arith.constant 0 : i32
    %0 = arith.cmpi eq, %arg1, %c0_i32 : i32
    %1 = arith.extui %0 : i1 to i32
    %c0_i32_0 = arith.constant 0 : i32
    %2 = arith.cmpi ne, %1, %c0_i32_0 : i32
    scf.if %2 {
      %cst_9 = arith.constant 0.000000e+00 : f32
      %16 = vector.broadcast %cst_9 : f32 to vector<128x8xf32>
      %c0_10 = arith.constant 0 : index
      %c0_11 = arith.constant 0 : index
      %17 = vector.load %arg9[%c0_10, %c0_11] : memref<128x8xf32, #tpu.memory_space<vmem>>, vector<128x8xf32>
      tpu.vector_store %arg9[%c0_10, %c0_11], %16 {strides = array<i32>} : memref<128x8xf32, #tpu.memory_space<vmem>>, vector<128x8xf32>,
    } else {
    }
    %c128_i32 = arith.constant 128 : i32
    %3 = arith.muli %arg1, %c128_i32 : i32
    %4 = tpu.assume_multiple %3, 128 : i32
    %5 = arith.index_cast %4 : i32 to index
    %c0 = arith.constant 0 : index
    %6 = vector.load %arg3[%5, %c0] : memref<128x8xbf16, #tpu.memory_space<vmem>>, vector<128x8xbf16>
    %c0_1 = arith.constant 0 : index
    %c0_2 = arith.constant 0 : index
    %7 = vector.load %arg9[%c0_1, %c0_2] : memref<128x8xf32, #tpu.memory_space<vmem>>, vector<128x8xf32>
    %c0_3 = arith.constant 0 : index
    %c0_4 = arith.constant 0 : index
    %8 = vector.load %arg2[%c0_3, %c0_4] : memref<128x128xi8, #tpu.memory_space<vmem>>, vector<128x128xi8>
    %9 = arith.sitofp %8 : vector<128x128xi8> to vector<128x128xbf16>
    %cst = arith.constant dense<0.000000e+00> : vector<128x8xf32>
    %10 = tpu.matmul %9, %6, %cst {dimension_numbers = #tpu.dot_dimension_numbers<[1], [0], [0], [1], [0, 0, 1, 1], [], []>} : vector<128x128xbf16>, vector<128x8xbf16>, vector<128x8xf32> -> vector<128x8xf32>
    %11 = arith.addf %7, %10 : vector<128x8xf32>
    %c0_5 = arith.constant 0 : index
    %c0_6 = arith.constant 0 : index
    %12 = vector.load %arg9[%c0_5, %c0_6] : memref<128x8xf32, #tpu.memory_space<vmem>>, vector<128x8xf32>
    tpu.vector_store %arg9[%c0_5, %c0_6], %11 {strides = array<i32>} : memref<128x8xf32, #tpu.memory_space<vmem>>, vector<128x8xf32>,
    %c0_i32_7 = arith.constant 0 : i32
    %13 = arith.cmpi eq, %arg1, %c0_i32_7 : i32
    %14 = arith.extui %13 : i1 to i32
    %c0_i32_8 = arith.constant 0 : i32
    %15 = arith.cmpi ne, %14, %c0_i32_8 : i32
    scf.if %15 {
      %c0_9 = arith.constant 0 : index
      %c0_10 = arith.constant 0 : index
      %16 = vector.load %arg4[%c0_9, %c0_10] : memref<128x1xf32, #tpu.memory_space<vmem>>, vector<128x1xf32>
      %c0_11 = arith.constant 0 : index
      %c0_12 = arith.constant 0 : index
      %17 = vector.load %arg9[%c0_11, %c0_12] : memref<128x8xf32, #tpu.memory_space<vmem>>, vector<128x8xf32>
      %18 = vector.broadcast %16 : vector<128x1xf32> to vector<128x8xf32>
      %19 = arith.mulf %18, %17 : vector<128x8xf32>
      %c0_13 = arith.constant 0 : index
      %c0_14 = arith.constant 0 : index
      %20 = vector.load %arg5[%c0_13, %c0_14] : memref<8x32xf32, #tpu.memory_space<vmem>>, vector<8x32xf32>
      %cst_15 = arith.constant dense<0.000000e+00> : vector<128x32xf32>
      %21 = tpu.matmul %19, %20, %cst_15 {dimension_numbers = #tpu.dot_dimension_numbers<[1], [0], [0], [1], [0, 0, 1, 1], [], []>} : vector<128x8xf32>, vector<8x32xf32>, vector<128x32xf32> -> vector<128x32xf32>
      %c0_16 = arith.constant 0 : index
      %c0_17 = arith.constant 0 : index
      %22 = vector.load %arg6[%c0_16, %c0_17] : memref<1x32xf32, #tpu.memory_space<vmem>>, vector<1x32xf32>
      %23 = vector.broadcast %22 : vector<1x32xf32> to vector<128x32xf32>
      %24 = arith.addf %21, %23 : vector<128x32xf32>
      %25 = math.tanh %24 : vector<128x32xf32>
      %c0_18 = arith.constant 0 : index
      %c0_19 = arith.constant 0 : index
      %26 = vector.load %arg7[%c0_18, %c0_19] : memref<32x128xf32, #tpu.memory_space<vmem>>, vector<32x128xf32>
      %cst_20 = arith.constant dense<0.000000e+00> : vector<128x128xf32>
      %27 = tpu.matmul %25, %26, %cst_20 {dimension_numbers = #tpu.dot_dimension_numbers<[1], [0], [0], [1], [0, 0, 1, 1], [], []>} : vector<128x32xf32>, vector<32x128xf32>, vector<128x128xf32> -> vector<128x128xf32>
      %c0_21 = arith.constant 0 : index
      %c0_22 = arith.constant 0 : index
      %28 = vector.load %arg4[%c0_21, %c0_22] : memref<128x1xf32, #tpu.memory_space<vmem>>, vector<128x1xf32>
      %29 = vector.broadcast %28 : vector<128x1xf32> to vector<128x128xf32>
      %30 = arith.mulf %29, %27 : vector<128x128xf32>
      %31 = arith.truncf %30 : vector<128x128xf32> to vector<128x128xbf16>
      %c0_23 = arith.constant 0 : index
      %c0_24 = arith.constant 0 : index
      %32 = vector.load %arg8[%c0_23, %c0_24] : memref<128x128xbf16, #tpu.memory_space<vmem>>, vector<128x128xbf16>
      tpu.vector_store %arg8[%c0_23, %c0_24], %31 {strides = array<i32>} : memref<128x128xbf16, #tpu.memory_space<vmem>>, vector<128x128xbf16>,
    } else {
    }
    return
  }
  func.func @transform_0(%arg0: i32, %arg1: i32) -> (i32, i32) {
    %c0_i32 = arith.constant 0 : i32
    return %arg0, %arg1 : i32, i32
  }
  func.func @transform_1(%arg0: i32, %arg1: i32) -> (i32, i32) {
    %c0_i32 = arith.constant 0 : i32
    %c0_i32_0 = arith.constant 0 : i32
    %c0_i32_1 = arith.constant 0 : i32
    return %c0_i32, %c0_i32_0 : i32, i32
  }
  func.func @transform_2(%arg0: i32, %arg1: i32) -> (i32, i32) {
    %c0_i32 = arith.constant 0 : i32
    %c0_i32_0 = arith.constant 0 : i32
    return %arg0, %c0_i32 : i32, i32
  }
  func.func @transform_3(%arg0: i32, %arg1: i32) -> (i32, i32) {
    %c0_i32 = arith.constant 0 : i32
    %c0_i32_0 = arith.constant 0 : i32
    %c0_i32_1 = arith.constant 0 : i32
    return %c0_i32, %c0_i32_0 : i32, i32
  }
  func.func @transform_4(%arg0: i32, %arg1: i32) -> (i32, i32) {
    %c0_i32 = arith.constant 0 : i32
    %c0_i32_0 = arith.constant 0 : i32
    %c0_i32_1 = arith.constant 0 : i32
    return %c0_i32, %c0_i32_0 : i32, i32
  }
  func.func @transform_5(%arg0: i32, %arg1: i32) -> (i32, i32) {
    %c0_i32 = arith.constant 0 : i32
    %c0_i32_0 = arith.constant 0 : i32
    %c0_i32_1 = arith.constant 0 : i32
    return %c0_i32, %c0_i32_0 : i32, i32
  }
  func.func @transform_6(%arg0: i32, %arg1: i32) -> (i32, i32) {
    %c0_i32 = arith.constant 0 : i32
    %c0_i32_0 = arith.constant 0 : i32
    return %arg0, %c0_i32 : i32, i32
  }
}

module attributes {stable_mosaic.version = 11 : i64} {
  func.func @conv2_pool_kernel(%arg0: i32, %arg1: i32, %arg2: memref<128x128xi8, #tpu.memory_space<vmem>>, %arg3: memref<128x128xbf16, #tpu.memory_space<vmem>>, %arg4: memref<128x1xf32, #tpu.memory_space<vmem>>, %arg5: memref<1x128xf32, #tpu.memory_space<vmem>>, %arg6: memref<2x128xf32, #tpu.memory_space<vmem>>, %arg7: memref<1x2x128xf32, #tpu.memory_space<vmem>>, %arg8: memref<128x128xf32, #tpu.memory_space<vmem>>) attributes {dimension_semantics = [#tpu.dimension_semantics<parallel>, #tpu.dimension_semantics<arbitrary>], iteration_bounds = array<i64: 1, 1>, scalar_prefetch = 0 : i64, scratch_operands = 1 : i64, tpu.core_type = #tpu.core_type<tc>, window_params = [{transform_indices = @transform_0, window_bounds = array<i64: 128, 128>}, {pipeline_mode = #tpu.pipeline_mode<synchronous>, transform_indices = @transform_1, window_bounds = array<i64: 128, 128>}, {transform_indices = @transform_2, window_bounds = array<i64: 128, 1>}, {pipeline_mode = #tpu.pipeline_mode<synchronous>, transform_indices = @transform_3, window_bounds = array<i64: 1, 128>}, {transform_indices = @transform_4, window_bounds = array<i64: 2, 128>}, {transform_indices = @transform_5, window_bounds = array<i64: 1, 2, 128>}]} {
    %c0_i32 = arith.constant 0 : i32
    %0 = arith.cmpi eq, %arg1, %c0_i32 : i32
    %1 = arith.extui %0 : i1 to i32
    %c0_i32_0 = arith.constant 0 : i32
    %2 = arith.cmpi ne, %1, %c0_i32_0 : i32
    scf.if %2 {
      %cst_9 = arith.constant 0.000000e+00 : f32
      %16 = vector.broadcast %cst_9 : f32 to vector<128x128xf32>
      %c0_10 = arith.constant 0 : index
      %c0_11 = arith.constant 0 : index
      %17 = vector.load %arg8[%c0_10, %c0_11] : memref<128x128xf32, #tpu.memory_space<vmem>>, vector<128x128xf32>
      tpu.vector_store %arg8[%c0_10, %c0_11], %16 {strides = array<i32>} : memref<128x128xf32, #tpu.memory_space<vmem>>, vector<128x128xf32>,
    } else {
    }
    %c128_i32 = arith.constant 128 : i32
    %3 = arith.muli %arg1, %c128_i32 : i32
    %4 = tpu.assume_multiple %3, 128 : i32
    %5 = arith.index_cast %4 : i32 to index
    %c0 = arith.constant 0 : index
    %6 = vector.load %arg3[%5, %c0] : memref<128x128xbf16, #tpu.memory_space<vmem>>, vector<128x128xbf16>
    %c0_1 = arith.constant 0 : index
    %c0_2 = arith.constant 0 : index
    %7 = vector.load %arg8[%c0_1, %c0_2] : memref<128x128xf32, #tpu.memory_space<vmem>>, vector<128x128xf32>
    %c0_3 = arith.constant 0 : index
    %c0_4 = arith.constant 0 : index
    %8 = vector.load %arg2[%c0_3, %c0_4] : memref<128x128xi8, #tpu.memory_space<vmem>>, vector<128x128xi8>
    %9 = arith.sitofp %8 : vector<128x128xi8> to vector<128x128xbf16>
    %cst = arith.constant dense<0.000000e+00> : vector<128x128xf32>
    %10 = tpu.matmul %9, %6, %cst {dimension_numbers = #tpu.dot_dimension_numbers<[1], [0], [0], [1], [0, 0, 1, 1], [], []>} : vector<128x128xbf16>, vector<128x128xbf16>, vector<128x128xf32> -> vector<128x128xf32>
    %11 = arith.addf %7, %10 : vector<128x128xf32>
    %c0_5 = arith.constant 0 : index
    %c0_6 = arith.constant 0 : index
    %12 = vector.load %arg8[%c0_5, %c0_6] : memref<128x128xf32, #tpu.memory_space<vmem>>, vector<128x128xf32>
    tpu.vector_store %arg8[%c0_5, %c0_6], %11 {strides = array<i32>} : memref<128x128xf32, #tpu.memory_space<vmem>>, vector<128x128xf32>,
    %c0_i32_7 = arith.constant 0 : i32
    %13 = arith.cmpi eq, %arg1, %c0_i32_7 : i32
    %14 = arith.extui %13 : i1 to i32
    %c0_i32_8 = arith.constant 0 : i32
    %15 = arith.cmpi ne, %14, %c0_i32_8 : i32
    scf.if %15 {
      %c0_9 = arith.constant 0 : index
      %c0_10 = arith.constant 0 : index
      %16 = vector.load %arg4[%c0_9, %c0_10] : memref<128x1xf32, #tpu.memory_space<vmem>>, vector<128x1xf32>
      %c0_11 = arith.constant 0 : index
      %c0_12 = arith.constant 0 : index
      %17 = vector.load %arg8[%c0_11, %c0_12] : memref<128x128xf32, #tpu.memory_space<vmem>>, vector<128x128xf32>
      %18 = vector.broadcast %16 : vector<128x1xf32> to vector<128x128xf32>
      %19 = arith.mulf %18, %17 : vector<128x128xf32>
      %c0_13 = arith.constant 0 : index
      %c0_14 = arith.constant 0 : index
      %20 = vector.load %arg5[%c0_13, %c0_14] : memref<1x128xf32, #tpu.memory_space<vmem>>, vector<1x128xf32>
      %21 = vector.broadcast %20 : vector<1x128xf32> to vector<128x128xf32>
      %22 = arith.addf %19, %21 : vector<128x128xf32>
      %23 = math.tanh %22 : vector<128x128xf32>
      %c0_15 = arith.constant 0 : index
      %c0_16 = arith.constant 0 : index
      %24 = vector.load %arg6[%c0_15, %c0_16] : memref<2x128xf32, #tpu.memory_space<vmem>>, vector<2x128xf32>
      %cst_17 = arith.constant dense<0.000000e+00> : vector<2x128xf32>
      %25 = tpu.matmul %24, %23, %cst_17 {dimension_numbers = #tpu.dot_dimension_numbers<[1], [0], [0], [1], [0, 0, 1, 1], [], []>} : vector<2x128xf32>, vector<128x128xf32>, vector<2x128xf32> -> vector<2x128xf32>
      %c0_18 = arith.constant 0 : index
      %c0_19 = arith.constant 0 : index
      %c0_20 = arith.constant 0 : index
      %26 = vector.load %arg7[%c0_18, %c0_19, %c0_20] : memref<1x2x128xf32, #tpu.memory_space<vmem>>, vector<1x2x128xf32>
      %27 = vector.shape_cast %26 : vector<1x2x128xf32> to vector<2x128xf32>
      %28 = vector.shape_cast %25 : vector<2x128xf32> to vector<1x2x128xf32>
      tpu.vector_store %arg7[%c0_18, %c0_19, %c0_20], %28 {strides = array<i32>} : memref<1x2x128xf32, #tpu.memory_space<vmem>>, vector<1x2x128xf32>,
    } else {
    }
    return
  }
  func.func @transform_0(%arg0: i32, %arg1: i32) -> (i32, i32) {
    %c0_i32 = arith.constant 0 : i32
    return %arg0, %arg1 : i32, i32
  }
  func.func @transform_1(%arg0: i32, %arg1: i32) -> (i32, i32) {
    %c0_i32 = arith.constant 0 : i32
    %c0_i32_0 = arith.constant 0 : i32
    %c0_i32_1 = arith.constant 0 : i32
    return %c0_i32, %c0_i32_0 : i32, i32
  }
  func.func @transform_2(%arg0: i32, %arg1: i32) -> (i32, i32) {
    %c0_i32 = arith.constant 0 : i32
    %c0_i32_0 = arith.constant 0 : i32
    return %arg0, %c0_i32 : i32, i32
  }
  func.func @transform_3(%arg0: i32, %arg1: i32) -> (i32, i32) {
    %c0_i32 = arith.constant 0 : i32
    %c0_i32_0 = arith.constant 0 : i32
    %c0_i32_1 = arith.constant 0 : i32
    return %c0_i32, %c0_i32_0 : i32, i32
  }
  func.func @transform_4(%arg0: i32, %arg1: i32) -> (i32, i32) {
    %c0_i32 = arith.constant 0 : i32
    %c0_i32_0 = arith.constant 0 : i32
    return %c0_i32, %arg0 : i32, i32
  }
  func.func @transform_5(%arg0: i32, %arg1: i32) -> (i32, i32, i32) {
    %c0_i32 = arith.constant 0 : i32
    %c0_i32_0 = arith.constant 0 : i32
    %c0_i32_1 = arith.constant 0 : i32
    return %arg0, %c0_i32, %c0_i32_0 : i32, i32, i32
  }
}

</mosaic_0001>

<llo_original>
// kernel: _gcn_forward_impl.3
$region0: #{_gcn_forward_impl.3}
  #allocation0 [shape = 'u32[]', space=smem, size = 0x4, offset = 0x4, fixed_abs, tag = 'smem constant byte address 0x4 - core index']
  #allocation1 [shape = 'u32[144,128]{1,0:T(1,128)}', space=vmem, size = 0x12000, scoped, tag = 'internal scratch']
  #allocation2 [shape = 'f32[128,128]{1,0:T(8,128)}', space=vmem, size = 0x10000, scoped, tag = 'scratch operand']
  %s0 = inlined_call_operand.vmem [shape: s8[128,128], index: 0, kind: input, shape index: {}]
  %s1 = inlined_call_operand.vmem [shape: bf16[128,128], index: 1, kind: input, shape index: {}]
  %s2 = inlined_call_operand.vmem [shape: f32[128,1], index: 2, kind: input, shape index: {}]
  %s3 = inlined_call_operand.vmem [shape: f32[1,128], index: 3, kind: input, shape index: {}]
  %s4 = inlined_call_operand.vmem [shape: f32[2,128], index: 4, kind: input, shape index: {}]
  %s5 = inlined_call_operand.vmem [shape: f32[1,2,128], index: 5, kind: output, shape index: {}]
  %s6 = sld [smem:[#allocation0]]
  $region38: #{_gcn_forward_impl.3} parent=0
    _
  %s8 = ssub.s32 1, %s6
  %s9 = scalar_select 0, %s8, %s6
  // Predicated region
  $region2: #{_gcn_forward_impl.3} parent=0 // pred_check
    _
  $region3: #{_gcn_forward_impl.3} parent=0 // pred_check_branch
    %11 = sbr.rel (0) target = $region5
  $region4: #{_gcn_forward_impl.3} parent=0 // pred_region
    _
  $region5: #{_gcn_forward_impl.3} parent=0 // pred_fallthru
    _
  // Predicated region
  $region6: #{_gcn_forward_impl.3} parent=0 // pred_check
    _
  $region7: #{_gcn_forward_impl.3} parent=0 // pred_check_branch
    %13 = sbr.rel (0) target = $region9
  $region8: #{_gcn_forward_impl.3} parent=0 // pred_region
    _
  $region9: #{_gcn_forward_impl.3} parent=0 // pred_fallthru
    _
  // Predicated region
  $region10: #{_gcn_forward_impl.3} parent=0 // pred_check
    _
  $region11: #{_gcn_forward_impl.3} parent=0 // pred_check_branch
    %15 = sbr.rel (0) target = $region13
  $region12: #{_gcn_forward_impl.3} parent=0 // pred_region
    _
  $region13: #{_gcn_forward_impl.3} parent=0 // pred_fallthru
    _
  // Predicated region
  $region14: #{_gcn_forward_impl.3} parent=0 // pred_check
    _
  $region15: #{_gcn_forward_impl.3} parent=0 // pred_check_branch
    %17 = sbr.rel (0) target = $region17
  $region16: #{_gcn_forward_impl.3} parent=0 // pred_region
    _
  $region17: #{_gcn_forward_impl.3} parent=0 // pred_fallthru
    _
  // Predicated region
  $region18: #{_gcn_forward_impl.3} parent=0 // pred_check
    _
  $region19: #{_gcn_forward_impl.3} parent=0 // pred_check_branch
    %19 = sbr.rel (0) target = $region21
  $region20: #{_gcn_forward_impl.3} parent=0 // pred_region
    _
  $region21: #{_gcn_forward_impl.3} parent=0 // pred_fallthru
    _
  %p21 = scmp.eq.s32.totalorder 0, 0
  // Predicated region
  $region22: #{_gcn_forward_impl.3} parent=0 // pred_check
    %p22 = pneg %p21
  $region23: #{_gcn_forward_impl.3} parent=0 // pred_check_branch
    %24 = sbr.rel (%p22) target = $region25
  $region24: #{_gcn_forward_impl.3} parent=0 // pred_region
    %25 = vst [vmem:[#allocation2] sm:$0xff] 0.0
    %26 = vst [vmem:[#allocation2 + $0x8] sm:$0xff] 0.0
    %27 = vst [vmem:[#allocation2 + $0x10] sm:$0xff] 0.0
    %28 = vst [vmem:[#allocation2 + $0x18] sm:$0xff] 0.0
    %29 = vst [vmem:[#allocation2 + $0x20] sm:$0xff] 0.0
    %30 = vst [vmem:[#allocation2 + $0x28] sm:$0xff] 0.0
    %31 = vst [vmem:[#allocation2 + $0x30] sm:$0xff] 0.0
    %32 = vst [vmem:[#allocation2 + $0x38] sm:$0xff] 0.0
    %33 = vst [vmem:[#allocation2 + $0x40] sm:$0xff] 0.0
    %34 = vst [vmem:[#allocation2 + $0x48] sm:$0xff] 0.0
    %35 = vst [vmem:[#allocation2 + $0x50] sm:$0xff] 0.0
    %36 = vst [vmem:[#allocation2 + $0x58] sm:$0xff] 0.0
    %37 = vst [vmem:[#allocation2 + $0x60] sm:$0xff] 0.0
    %38 = vst [vmem:[#allocation2 + $0x68] sm:$0xff] 0.0
    %39 = vst [vmem:[#allocation2 + $0x70] sm:$0xff] 0.0
    %40 = vst [vmem:[#allocation2 + $0x78] sm:$0xff] 0.0
  $region25: #{_gcn_forward_impl.3} parent=0 // pred_fallthru
    _
  %s41 = smul.u32 0, 128
  %s42 = sshra.s32 %s41, 3
  %s43 = sand.u32 %s41, 7
  %s44 = smul.addr %s42, 4
  %s45 = scalar_lea.vmem %s1, %s44
  %v46 = vld [vmem:[%s45] sm:$0xf]
  %v47 = vld [vmem:[%s45 + $0x4] sm:$0xf]
  %v48 = vld [vmem:[%s45 + $0x8] sm:$0xf]
  %v49 = vld [vmem:[%s45 + $0xc] sm:$0xf]
  %v50 = vld [vmem:[%s45 + $0x10] sm:$0xf]
  %v51 = vld [vmem:[%s45 + $0x14] sm:$0xf]
  %v52 = vld [vmem:[%s45 + $0x18] sm:$0xf]
  %v53 = vld [vmem:[%s45 + $0x1c] sm:$0xf]
  %v54 = vld [vmem:[%s45 + $0x20] sm:$0xf]
  %v55 = vld [vmem:[%s45 + $0x24] sm:$0xf]
  %v56 = vld [vmem:[%s45 + $0x28] sm:$0xf]
  %v57 = vld [vmem:[%s45 + $0x2c] sm:$0xf]
  %v58 = vld [vmem:[%s45 + $0x30] sm:$0xf]
  %v59 = vld [vmem:[%s45 + $0x34] sm:$0xf]
  %v60 = vld [vmem:[%s45 + $0x38] sm:$0xf]
  %v61 = vld [vmem:[%s45 + $0x3c] sm:$0xf]
  %v62 = vld [vmem:[#allocation2] sm:$0xff]
  %v63 = vld [vmem:[#allocation2 + $0x8] sm:$0xff]
  %v64 = vld [vmem:[#allocation2 + $0x10] sm:$0xff]
  %v65 = vld [vmem:[#allocation2 + $0x18] sm:$0xff]
  %v66 = vld [vmem:[#allocation2 + $0x20] sm:$0xff]
  %v67 = vld [vmem:[#allocation2 + $0x28] sm:$0xff]
  %v68 = vld [vmem:[#allocation2 + $0x30] sm:$0xff]
  %v69 = vld [vmem:[#allocation2 + $0x38] sm:$0xff]
  %v70 = vld [vmem:[#allocation2 + $0x40] sm:$0xff]
  %v71 = vld [vmem:[#allocation2 + $0x48] sm:$0xff]
  %v72 = vld [vmem:[#allocation2 + $0x50] sm:$0xff]
  %v73 = vld [vmem:[#allocation2 + $0x58] sm:$0xff]
  %v74 = vld [vmem:[#allocation2 + $0x60] sm:$0xff]
  %v75 = vld [vmem:[#allocation2 + $0x68] sm:$0xff]
  %v76 = vld [vmem:[#allocation2 + $0x70] sm:$0xff]
  %v77 = vld [vmem:[#allocation2 + $0x78] sm:$0xff]
  %v78 = vld [vmem:[%s0] sm:$0x3]
  %v79 = vld [vmem:[%s0 + $0x2] sm:$0x3]
  %v80 = vld [vmem:[%s0 + $0x4] sm:$0x3]
  %v81 = vld [vmem:[%s0 + $0x6] sm:$0x3]
  %v82 = vld [vmem:[%s0 + $0x8] sm:$0x3]
  %v83 = vld [vmem:[%s0 + $0xa] sm:$0x3]
  %v84 = vld [vmem:[%s0 + $0xc] sm:$0x3]
  %v85 = vld [vmem:[%s0 + $0xe] sm:$0x3]
  %v86 = vld [vmem:[%s0 + $0x10] sm:$0x3]
  %v87 = vld [vmem:[%s0 + $0x12] sm:$0x3]
  %v88 = vld [vmem:[%s0 + $0x14] sm:$0x3]
  %v89 = vld [vmem:[%s0 + $0x16] sm:$0x3]
  %v90 = vld [vmem:[%s0 + $0x18] sm:$0x3]
  %v91 = vld [vmem:[%s0 + $0x1a] sm:$0x3]
  %v92 = vld [vmem:[%s0 + $0x1c] sm:$0x3]
  %v93 = vld [vmem:[%s0 + $0x1e] sm:$0x3]
  %v94 = vunpack.c.l.s8.bf16 %v78
  %v95 = vunpack.c.l.s8.bf16 %v79
  %v96 = vunpack.c.l.s8.bf16 %v80
  %v97 = vunpack.c.l.s8.bf16 %v81
  %v98 = vunpack.c.l.s8.bf16 %v82
  %v99 = vunpack.c.l.s8.bf16 %v83
  %v100 = vunpack.c.l.s8.bf16 %v84
  %v101 = vunpack.c.l.s8.bf16 %v85
  %v102 = vunpack.c.l.s8.bf16 %v86
  %v103 = vunpack.c.l.s8.bf16 %v87
  %v104 = vunpack.c.l.s8.bf16 %v88
  %v105 = vunpack.c.l.s8.bf16 %v89
  %v106 = vunpack.c.l.s8.bf16 %v90
  %v107 = vunpack.c.l.s8.bf16 %v91
  %v108 = vunpack.c.l.s8.bf16 %v92
  %v109 = vunpack.c.l.s8.bf16 %v93
  %v126 = vunpack.c.l.b16 %v94
  %v127 = vunpack.c.l.b16 %v95
  %v128 = vunpack.c.l.b16 %v96
  %v129 = vunpack.c.l.b16 %v97
  %v130 = vunpack.c.l.b16 %v98
  %v131 = vunpack.c.l.b16 %v99
  %v132 = vunpack.c.l.b16 %v100
  %v133 = vunpack.c.l.b16 %v101
  %v134 = vunpack.c.l.b16 %v102
  %v135 = vunpack.c.l.b16 %v103
  %v136 = vunpack.c.l.b16 %v104
  %v137 = vunpack.c.l.b16 %v105
  %v138 = vunpack.c.l.b16 %v106
  %v139 = vunpack.c.l.b16 %v107
  %v140 = vunpack.c.l.b16 %v108
  %v141 = vunpack.c.l.b16 %v109
  %v142 = vpack.c.b16 %v127, %v126
  %v143 = vpack.c.b16 %v129, %v128
  %v144 = vpack.c.b16 %v131, %v130
  %v145 = vpack.c.b16 %v133, %v132
  %v146 = vpack.c.b16 %v135, %v134
  %v147 = vpack.c.b16 %v137, %v136
  %v148 = vpack.c.b16 %v139, %v138
  %v149 = vpack.c.b16 %v141, %v140
  %v174 = vunpack.c.l.b16 %v46
  %v175 = vunpack.c.l.b16 %v47
  %v176 = vunpack.c.l.b16 %v48
  %v177 = vunpack.c.l.b16 %v49
  %v178 = vunpack.c.l.b16 %v50
  %v179 = vunpack.c.l.b16 %v51
  %v180 = vunpack.c.l.b16 %v52
  %v181 = vunpack.c.l.b16 %v53
  %v182 = vunpack.c.l.b16 %v54
  %v183 = vunpack.c.l.b16 %v55
  %v184 = vunpack.c.l.b16 %v56
  %v185 = vunpack.c.l.b16 %v57
  %v186 = vunpack.c.l.b16 %v58
  %v187 = vunpack.c.l.b16 %v59
  %v188 = vunpack.c.l.b16 %v60
  %v189 = vunpack.c.l.b16 %v61
  %v190 = vpack.c.b16 %v175, %v174
  %v191 = vpack.c.b16 %v177, %v176
  %v192 = vpack.c.b16 %v179, %v178
  %v193 = vpack.c.b16 %v181, %v180
  %v194 = vpack.c.b16 %v183, %v182
  %v195 = vpack.c.b16 %v185, %v184
  %v196 = vpack.c.b16 %v187, %v186
  %v197 = vpack.c.b16 %v189, %v188
  %206 = vmatprep.subr.bf16.mxu0 0
  %207 = vmatpush1.bf16.msra.mxu0 %v190
  %208 = vmatprep.subr.bf16.mxu0 0
  %209 = vmatpush1.bf16.msra.mxu0 %v191
  %210 = vmatprep.subr.bf16.mxu0 0
  %211 = vmatpush1.bf16.msra.mxu0 %v192
  %212 = vmatprep.subr.bf16.mxu0 0
  %213 = vmatpush1.bf16.msra.mxu0 %v193
  %214 = vmatprep.subr.bf16.mxu0 0
  %215 = vmatpush1.bf16.msra.mxu0 %v194
  %216 = vmatprep.subr.bf16.mxu0 0
  %217 = vmatpush1.bf16.msra.mxu0 %v195
  %218 = vmatprep.subr.bf16.mxu0 0
  %219 = vmatpush1.bf16.msra.mxu0 %v196
  %220 = vmatprep.subr.bf16.mxu0 0
  %221 = vmatpush1.bf16.msra.mxu0 %v197
  %222 = vmatprep.subr.bf16.mxu0 0
  %223 = vmatpush1.bf16.msra.mxu0 0
  %224 = vmatprep.subr.bf16.mxu0 0
  %225 = vmatpush1.bf16.msra.mxu0 0
  %226 = vmatprep.subr.bf16.mxu0 0
  %227 = vmatpush1.bf16.msra.mxu0 0
  %228 = vmatprep.subr.bf16.mxu0 0
  %229 = vmatpush1.bf16.msra.mxu0 0
  %230 = vmatprep.subr.bf16.mxu0 0
  %231 = vmatpush1.bf16.msra.mxu0 0
  %232 = vmatprep.subr.bf16.mxu0 0
  %233 = vmatpush1.bf16.msra.mxu0 0
  %234 = vmatprep.subr.bf16.mxu0 0
  %235 = vmatpush1.bf16.msra.mxu0 0
  %236 = vmatprep.subr.bf16.mxu0 0
  %237 = vmatpush1.bf16.msra.mxu0 0
  %238 = vmatprep.mubr.bf16.mxu0 0
  %239 = vmatmul.mubr.bf16.gmra.mrb[0].mxu0 %v142
  %v240 = vpop.f32.mrb[0].mxu0
  %v241 = vadd.f32 0.0, %v240
  %v242 = vpop.f32.mrb[0].mxu0
  %v243 = vpop.f32.mrb[0].mxu0
  %v244 = vadd.f32 0.0, %v243
  %v245 = vpop.f32.mrb[0].mxu0
  %246 = vmatprep.mubr.bf16.mxu0 0
  %247 = vmatmul.mubr.bf16.gmra.mrb[0].mxu0 %v143
  %v248 = vpop.f32.mrb[0].mxu0
  %v249 = vadd.f32 0.0, %v248
  %v250 = vpop.f32.mrb[0].mxu0
  %v251 = vpop.f32.mrb[0].mxu0
  %v252 = vadd.f32 0.0, %v251
  %v253 = vpop.f32.mrb[0].mxu0
  %254 = vmatprep.mubr.bf16.mxu0 0
  %255 = vmatmul.mubr.bf16.gmra.mrb[0].mxu0 %v144
  %v256 = vpop.f32.mrb[0].mxu0
  %v257 = vadd.f32 0.0, %v256
  %v258 = vpop.f32.mrb[0].mxu0
  %v259 = vpop.f32.mrb[0].mxu0
  %v260 = vadd.f32 0.0, %v259
  %v261 = vpop.f32.mrb[0].mxu0
  %262 = vmatprep.mubr.bf16.mxu0 0
  %263 = vmatmul.mubr.bf16.gmra.mrb[0].mxu0 %v145
  %v264 = vpop.f32.mrb[0].mxu0
  %v265 = vadd.f32 0.0, %v264
  %v266 = vpop.f32.mrb[0].mxu0
  %v267 = vpop.f32.mrb[0].mxu0
  %v268 = vadd.f32 0.0, %v267
  %v269 = vpop.f32.mrb[0].mxu0
  %270 = vmatprep.mubr.bf16.mxu0 0
  %271 = vmatmul.mubr.bf16.gmra.mrb[0].mxu0 %v146
  %v272 = vpop.f32.mrb[0].mxu0
  %v273 = vadd.f32 0.0, %v272
  %v274 = vpop.f32.mrb[0].mxu0
  %v275 = vpop.f32.mrb[0].mxu0
  %v276 = vadd.f32 0.0, %v275
  %v277 = vpop.f32.mrb[0].mxu0
  %278 = vmatprep.mubr.bf16.mxu0 0
  %279 = vmatmul.mubr.bf16.gmra.mrb[0].mxu0 %v147
  %v280 = vpop.f32.mrb[0].mxu0
  %v281 = vadd.f32 0.0, %v280
  %v282 = vpop.f32.mrb[0].mxu0
  %v283 = vpop.f32.mrb[0].mxu0
  %v284 = vadd.f32 0.0, %v283
  %v285 = vpop.f32.mrb[0].mxu0
  %286 = vmatprep.mubr.bf16.mxu0 0
  %287 = vmatmul.mubr.bf16.gmra.mrb[0].mxu0 %v148
  %v288 = vpop.f32.mrb[0].mxu0
  %v289 = vadd.f32 0.0, %v288
  %v290 = vpop.f32.mrb[0].mxu0
  %v291 = vpop.f32.mrb[0].mxu0
  %v292 = vadd.f32 0.0, %v291
  %v293 = vpop.f32.mrb[0].mxu0
  %294 = vmatprep.mubr.bf16.mxu0 0
  %295 = vmatmul.mubr.bf16.gmra.mrb[0].mxu0 %v149
  %v296 = vpop.f32.mrb[0].mxu0
  %v297 = vadd.f32 0.0, %v296
  %v298 = vpop.f32.mrb[0].mxu0
  %v299 = vpop.f32.mrb[0].mxu0
  %v300 = vadd.f32 0.0, %v299
  %v301 = vpop.f32.mrb[0].mxu0
  %302 = vdwg.mxu0
  %v303 = vadd.f32 %v62, %v241
  %v304 = vadd.f32 %v63, %v244
  %v305 = vadd.f32 %v64, %v249
  %v306 = vadd.f32 %v65, %v252
  %v307 = vadd.f32 %v66, %v257
  %v308 = vadd.f32 %v67, %v260
  %v309 = vadd.f32 %v68, %v265
  %v310 = vadd.f32 %v69, %v268
  %v311 = vadd.f32 %v70, %v273
  %v312 = vadd.f32 %v71, %v276
  %v313 = vadd.f32 %v72, %v281
  %v314 = vadd.f32 %v73, %v284
  %v315 = vadd.f32 %v74, %v289
  %v316 = vadd.f32 %v75, %v292
  %v317 = vadd.f32 %v76, %v297
  %v318 = vadd.f32 %v77, %v300
  %319 = vst [vmem:[#allocation2] sm:$0xff] %v303
  %320 = vst [vmem:[#allocation2 + $0x8] sm:$0xff] %v304
  %321 = vst [vmem:[#allocation2 + $0x10] sm:$0xff] %v305
  %322 = vst [vmem:[#allocation2 + $0x18] sm:$0xff] %v306
  %323 = vst [vmem:[#allocation2 + $0x20] sm:$0xff] %v307
  %324 = vst [vmem:[#allocation2 + $0x28] sm:$0xff] %v308
  %325 = vst [vmem:[#allocation2 + $0x30] sm:$0xff] %v309
  %326 = vst [vmem:[#allocation2 + $0x38] sm:$0xff] %v310
  %327 = vst [vmem:[#allocation2 + $0x40] sm:$0xff] %v311
  %328 = vst [vmem:[#allocation2 + $0x48] sm:$0xff] %v312
  %329 = vst [vmem:[#allocation2 + $0x50] sm:$0xff] %v313
  %330 = vst [vmem:[#allocation2 + $0x58] sm:$0xff] %v314
  %331 = vst [vmem:[#allocation2 + $0x60] sm:$0xff] %v315
  %332 = vst [vmem:[#allocation2 + $0x68] sm:$0xff] %v316
  %333 = vst [vmem:[#allocation2 + $0x70] sm:$0xff] %v317
  %334 = vst [vmem:[#allocation2 + $0x78] sm:$0xff] %v318
  // Predicated region
  $region26: #{_gcn_forward_impl.3} parent=0 // pred_check
    %p335 = pneg %p21
  $region27: #{_gcn_forward_impl.3} parent=0 // pred_check_branch
    %337 = sbr.rel (%p335) target = $region29
  $region28: #{_gcn_forward_impl.3} parent=0 // pred_region
    %v338 = vld [vmem:[%s2] sm:$0xff]
    %v339 = vld [vmem:[%s2 + $0x8] sm:$0xff]
    %v340 = vld [vmem:[%s2 + $0x10] sm:$0xff]
    %v341 = vld [vmem:[%s2 + $0x18] sm:$0xff]
    %v342 = vld [vmem:[%s2 + $0x20] sm:$0xff]
    %v343 = vld [vmem:[%s2 + $0x28] sm:$0xff]
    %v344 = vld [vmem:[%s2 + $0x30] sm:$0xff]
    %v345 = vld [vmem:[%s2 + $0x38] sm:$0xff]
    %v346 = vld [vmem:[%s2 + $0x40] sm:$0xff]
    %v347 = vld [vmem:[%s2 + $0x48] sm:$0xff]
    %v348 = vld [vmem:[%s2 + $0x50] sm:$0xff]
    %v349 = vld [vmem:[%s2 + $0x58] sm:$0xff]
    %v350 = vld [vmem:[%s2 + $0x60] sm:$0xff]
    %v351 = vld [vmem:[%s2 + $0x68] sm:$0xff]
    %v352 = vld [vmem:[%s2 + $0x70] sm:$0xff]
    %v353 = vld [vmem:[%s2 + $0x78] sm:$0xff]
    %v354 = vld [vmem:[#allocation2] sm:$0xff]
    %v355 = vld [vmem:[#allocation2 + $0x8] sm:$0xff]
    %v356 = vld [vmem:[#allocation2 + $0x10] sm:$0xff]
    %v357 = vld [vmem:[#allocation2 + $0x18] sm:$0xff]
    %v358 = vld [vmem:[#allocation2 + $0x20] sm:$0xff]
    %v359 = vld [vmem:[#allocation2 + $0x28] sm:$0xff]
    %v360 = vld [vmem:[#allocation2 + $0x30] sm:$0xff]
    %v361 = vld [vmem:[#allocation2 + $0x38] sm:$0xff]
    %v362 = vld [vmem:[#allocation2 + $0x40] sm:$0xff]
    %v363 = vld [vmem:[#allocation2 + $0x48] sm:$0xff]
    %v364 = vld [vmem:[#allocation2 + $0x50] sm:$0xff]
    %v365 = vld [vmem:[#allocation2 + $0x58] sm:$0xff]
    %v366 = vld [vmem:[#allocation2 + $0x60] sm:$0xff]
    %v367 = vld [vmem:[#allocation2 + $0x68] sm:$0xff]
    %v368 = vld [vmem:[#allocation2 + $0x70] sm:$0xff]
    %v369 = vld [vmem:[#allocation2 + $0x78] sm:$0xff]
    %371 = vset.pattern.permute.xlu0 0
    %372 = vperm.xlu0 %371, %v338
    %v373 = vpop.permute.xlu0 %372
    %376 = vset.pattern.permute.xlu0 0
    %377 = vperm.xlu0 %376, %v339
    %v378 = vpop.permute.xlu0 %377
    %381 = vset.pattern.permute.xlu0 0
    %382 = vperm.xlu0 %381, %v340
    %v383 = vpop.permute.xlu0 %382
    %386 = vset.pattern.permute.xlu0 0
    %387 = vperm.xlu0 %386, %v341
    %v388 = vpop.permute.xlu0 %387
    %391 = vset.pattern.permute.xlu0 0
    %392 = vperm.xlu0 %391, %v342
    %v393 = vpop.permute.xlu0 %392
    %396 = vset.pattern.permute.xlu0 0
    %397 = vperm.xlu0 %396, %v343
    %v398 = vpop.permute.xlu0 %397
    %401 = vset.pattern.permute.xlu0 0
    %402 = vperm.xlu0 %401, %v344
    %v403 = vpop.permute.xlu0 %402
    %406 = vset.pattern.permute.xlu0 0
    %407 = vperm.xlu0 %406, %v345
    %v408 = vpop.permute.xlu0 %407
    %411 = vset.pattern.permute.xlu0 0
    %412 = vperm.xlu0 %411, %v346
    %v413 = vpop.permute.xlu0 %412
    %416 = vset.pattern.permute.xlu0 0
    %417 = vperm.xlu0 %416, %v347
    %v418 = vpop.permute.xlu0 %417
    %421 = vset.pattern.permute.xlu0 0
    %422 = vperm.xlu0 %421, %v348
    %v423 = vpop.permute.xlu0 %422
    %426 = vset.pattern.permute.xlu0 0
    %427 = vperm.xlu0 %426, %v349
    %v428 = vpop.permute.xlu0 %427
    %431 = vset.pattern.permute.xlu0 0
    %432 = vperm.xlu0 %431, %v350
    %v433 = vpop.permute.xlu0 %432
    %436 = vset.pattern.permute.xlu0 0
    %437 = vperm.xlu0 %436, %v351
    %v438 = vpop.permute.xlu0 %437
    %441 = vset.pattern.permute.xlu0 0
    %442 = vperm.xlu0 %441, %v352
    %v443 = vpop.permute.xlu0 %442
    %446 = vset.pattern.permute.xlu0 0
    %447 = vperm.xlu0 %446, %v353
    %v448 = vpop.permute.xlu0 %447
    %v450 = vmul.f32 %v373, %v354
    %v451 = vmul.f32 %v378, %v355
    %v452 = vmul.f32 %v383, %v356
    %v453 = vmul.f32 %v388, %v357
    %v454 = vmul.f32 %v393, %v358
    %v455 = vmul.f32 %v398, %v359
    %v456 = vmul.f32 %v403, %v360
    %v457 = vmul.f32 %v408, %v361
    %v458 = vmul.f32 %v413, %v362
    %v459 = vmul.f32 %v418, %v363
    %v460 = vmul.f32 %v423, %v364
    %v461 = vmul.f32 %v428, %v365
    %v462 = vmul.f32 %v433, %v366
    %v463 = vmul.f32 %v438, %v367
    %v464 = vmul.f32 %v443, %v368
    %v465 = vmul.f32 %v448, %v369
    %v466 = vld [vmem:[%s3] sm:$0x1]
    %v468 = vlaneseq
    %v469 = vshrl.u32 %v468, 7
    %v470 = vsub.s32 0, %v469
    %v471 = vrot.slane %v466, %v470
    %v473 = vadd.f32 %v450, %v471
    %v474 = vadd.f32 %v451, %v471
    %v475 = vadd.f32 %v452, %v471
    %v476 = vadd.f32 %v453, %v471
    %v477 = vadd.f32 %v454, %v471
    %v478 = vadd.f32 %v455, %v471
    %v479 = vadd.f32 %v456, %v471
    %v480 = vadd.f32 %v457, %v471
    %v481 = vadd.f32 %v458, %v471
    %v482 = vadd.f32 %v459, %v471
    %v483 = vadd.f32 %v460, %v471
    %v484 = vadd.f32 %v461, %v471
    %v485 = vadd.f32 %v462, %v471
    %v486 = vadd.f32 %v463, %v471
    %v487 = vadd.f32 %v464, %v471
    %v488 = vadd.f32 %v465, %v471
    %v489 = vtanh.pop %v473
    %v490 = vtanh.pop %v474
    %v491 = vtanh.pop %v475
    %v492 = vtanh.pop %v476
    %v493 = vtanh.pop %v477
    %v494 = vtanh.pop %v478
    %v495 = vtanh.pop %v479
    %v496 = vtanh.pop %v480
    %v497 = vtanh.pop %v481
    %v498 = vtanh.pop %v482
    %v499 = vtanh.pop %v483
    %v500 = vtanh.pop %v484
    %v501 = vtanh.pop %v485
    %v502 = vtanh.pop %v486
    %v503 = vtanh.pop %v487
    %v504 = vtanh.pop %v488
    %v505 = vld [vmem:[%s4] sm:$0x3]
    %506 = vmatprep.subr.mxu0 0.0
    %507 = vmatpush1.msra.mxu0 %v489
    %508 = vmatprep.subr.mxu0 0.0
    %509 = vmatpush1.msra.mxu0 %v490
    %510 = vmatprep.subr.mxu0 0.0
    %511 = vmatpush1.msra.mxu0 %v491
    %512 = vmatprep.subr.mxu0 0.0
    %513 = vmatpush1.msra.mxu0 %v492
    %514 = vmatprep.subr.mxu0 0.0
    %515 = vmatpush1.msra.mxu0 %v493
    %516 = vmatprep.subr.mxu0 0.0
    %517 = vmatpush1.msra.mxu0 %v494
    %518 = vmatprep.subr.mxu0 0.0
    %519 = vmatpush1.msra.mxu0 %v495
    %520 = vmatprep.subr.mxu0 0.0
    %521 = vmatpush1.msra.mxu0 %v496
    %522 = vmatprep.subr.mxu0 0.0
    %523 = vmatpush1.msra.mxu0 %v497
    %524 = vmatprep.subr.mxu0 0.0
    %525 = vmatpush1.msra.mxu0 %v498
    %526 = vmatprep.subr.mxu0 0.0
    %527 = vmatpush1.msra.mxu0 %v499
    %528 = vmatprep.subr.mxu0 0.0
    %529 = vmatpush1.msra.mxu0 %v500
    %530 = vmatprep.subr.mxu0 0.0
    %531 = vmatpush1.msra.mxu0 %v501
    %532 = vmatprep.subr.mxu0 0.0
    %533 = vmatpush1.msra.mxu0 %v502
    %534 = vmatprep.subr.mxu0 0.0
    %535 = vmatpush1.msra.mxu0 %v503
    %536 = vmatprep.subr.mxu0 0.0
    %537 = vmatpush1.msra.mxu0 %v504
    %538 = vmatprep.subr.mxu0 0.0
    %539 = vmatpush1.msra.mxu0 0.0
    %540 = vmatprep.subr.mxu0 0.0
    %541 = vmatpush1.msra.mxu0 0.0
    %542 = vmatprep.subr.mxu0 0.0
    %543 = vmatpush1.msra.mxu0 0.0
    %544 = vmatprep.subr.mxu0 0.0
    %545 = vmatpush1.msra.mxu0 0.0
    %546 = vmatprep.subr.mxu0 0.0
    %547 = vmatpush1.msra.mxu0 0.0
    %548 = vmatprep.subr.mxu0 0.0
    %549 = vmatpush1.msra.mxu0 0.0
    %550 = vmatprep.subr.mxu0 0.0
    %551 = vmatpush1.msra.mxu0 0.0
    %552 = vmatprep.subr.mxu0 0.0
    %553 = vmatpush1.msra.mxu0 0.0
    %554 = vmatprep.subr.mxu0 0.0
    %555 = vmatpush1.msra.mxu0 0.0
    %556 = vmatprep.subr.mxu0 0.0
    %557 = vmatpush1.msra.mxu0 0.0
    %558 = vmatprep.subr.mxu0 0.0
    %559 = vmatpush1.msra.mxu0 0.0
    %560 = vmatprep.subr.mxu0 0.0
    %561 = vmatpush1.msra.mxu0 0.0
    %562 = vmatprep.subr.mxu0 0.0
    %563 = vmatpush1.msra.mxu0 0.0
    %564 = vmatprep.subr.mxu0 0.0
    %565 = vmatpush1.msra.mxu0 0.0
    %566 = vmatprep.subr.mxu0 0.0
    %567 = vmatpush1.msra.mxu0 0.0
    %568 = vmatprep.subr.mxu0 0.0
    %569 = vmatpush1.msra.mxu0 0.0
    %570 = vmatprep.mubr.f32.mxu0 0.0
    %571 = vmatmul.mubr.f32.gmra.mrb[0].mxu0 %v505
    %v572 = vpop.f32.mrb[0].mxu0
    %v573 = vadd.f32 0.0, %v572
    %v574 = vpop.f32.mrb[0].mxu0
    %575 = vdwg.mxu0
    %576 = vst [vmem:[%s5] sm:$0x3] %v573
  $region29: #{_gcn_forward_impl.3} parent=0 // pred_fallthru
    _
  // Predicated region
  $region30: #{_gcn_forward_impl.3} parent=0 // pred_check
    _
  $region31: #{_gcn_forward_impl.3} parent=0 // pred_check_branch
    %578 = sbr.rel (0) target = $region33
  $region32: #{_gcn_forward_impl.3} parent=0 // pred_region
    _
  $region33: #{_gcn_forward_impl.3} parent=0 // pred_fallthru
    _
  // Predicated region
  $region34: #{_gcn_forward_impl.3} parent=0 // pred_check
    _
  $region35: #{_gcn_forward_impl.3} parent=0 // pred_check_branch
    %580 = sbr.rel (0) target = $region37
  $region36: #{_gcn_forward_impl.3} parent=0 // pred_region
    _
  $region37: #{_gcn_forward_impl.3} parent=0 // pred_fallthru
    _

// kernel: _gcn_forward_impl.2
$region0: #{_gcn_forward_impl.2}
  #allocation0 [shape = 'u32[]', space=smem, size = 0x4, offset = 0x4, fixed_abs, tag = 'smem constant byte address 0x4 - core index']
  #allocation1 [shape = 'u32[144,128]{1,0:T(1,128)}', space=vmem, size = 0x12000, scoped, tag = 'internal scratch']
  #allocation2 [shape = 'f32[128,8]{1,0:T(8,128)}', space=vmem, size = 0x10000, scoped, tag = 'scratch operand']
  %s0 = inlined_call_operand.vmem [shape: s8[128,128], index: 0, kind: input, shape index: {}]
  %s1 = inlined_call_operand.vmem [shape: bf16[128,8], index: 1, kind: input, shape index: {}]
  %s2 = inlined_call_operand.vmem [shape: f32[128,1], index: 2, kind: input, shape index: {}]
  %s3 = inlined_call_operand.vmem [shape: f32[8,32], index: 3, kind: input, shape index: {}]
  %s4 = inlined_call_operand.vmem [shape: f32[1,32], index: 4, kind: input, shape index: {}]
  %s5 = inlined_call_operand.vmem [shape: f32[32,128], index: 5, kind: input, shape index: {}]
  %s6 = inlined_call_operand.vmem [shape: bf16[128,128], index: 6, kind: output, shape index: {}]
  %s7 = sld [smem:[#allocation0]]
  $region42: #{_gcn_forward_impl.2} parent=0
    _
  %s9 = ssub.s32 1, %s7
  %s10 = scalar_select 0, %s9, %s7
  // Predicated region
  $region2: #{_gcn_forward_impl.2} parent=0 // pred_check
    _
  $region3: #{_gcn_forward_impl.2} parent=0 // pred_check_branch
    %12 = sbr.rel (0) target = $region5
  $region4: #{_gcn_forward_impl.2} parent=0 // pred_region
    _
  $region5: #{_gcn_forward_impl.2} parent=0 // pred_fallthru
    _
  // Predicated region
  $region6: #{_gcn_forward_impl.2} parent=0 // pred_check
    _
  $region7: #{_gcn_forward_impl.2} parent=0 // pred_check_branch
    %14 = sbr.rel (0) target = $region9
  $region8: #{_gcn_forward_impl.2} parent=0 // pred_region
    _
  $region9: #{_gcn_forward_impl.2} parent=0 // pred_fallthru
    _
  // Predicated region
  $region10: #{_gcn_forward_impl.2} parent=0 // pred_check
    _
  $region11: #{_gcn_forward_impl.2} parent=0 // pred_check_branch
    %16 = sbr.rel (0) target = $region13
  $region12: #{_gcn_forward_impl.2} parent=0 // pred_region
    _
  $region13: #{_gcn_forward_impl.2} parent=0 // pred_fallthru
    _
  // Predicated region
  $region14: #{_gcn_forward_impl.2} parent=0 // pred_check
    _
  $region15: #{_gcn_forward_impl.2} parent=0 // pred_check_branch
    %18 = sbr.rel (0) target = $region17
  $region16: #{_gcn_forward_impl.2} parent=0 // pred_region
    _
  $region17: #{_gcn_forward_impl.2} parent=0 // pred_fallthru
    _
  // Predicated region
  $region18: #{_gcn_forward_impl.2} parent=0 // pred_check
    _
  $region19: #{_gcn_forward_impl.2} parent=0 // pred_check_branch
    %20 = sbr.rel (0) target = $region21
  $region20: #{_gcn_forward_impl.2} parent=0 // pred_region
    _
  $region21: #{_gcn_forward_impl.2} parent=0 // pred_fallthru
    _
  // Predicated region
  $region22: #{_gcn_forward_impl.2} parent=0 // pred_check
    _
  $region23: #{_gcn_forward_impl.2} parent=0 // pred_check_branch
    %22 = sbr.rel (0) target = $region25
  $region24: #{_gcn_forward_impl.2} parent=0 // pred_region
    _
  $region25: #{_gcn_forward_impl.2} parent=0 // pred_fallthru
    _
  %p24 = scmp.eq.s32.totalorder 0, 0
  // Predicated region
  $region26: #{_gcn_forward_impl.2} parent=0 // pred_check
    %p25 = pneg %p24
  $region27: #{_gcn_forward_impl.2} parent=0 // pred_check_branch
    %27 = sbr.rel (%p25) target = $region29
  $region28: #{_gcn_forward_impl.2} parent=0 // pred_region
    %vm28 = vcmask 64512
    %29 = vst.msk [vmem:[#allocation2] sm:$0xff] %vm28, 0.0
    %30 = vst.msk [vmem:[#allocation2 + $0x8] sm:$0xff] %vm28, 0.0
    %31 = vst.msk [vmem:[#allocation2 + $0x10] sm:$0xff] %vm28, 0.0
    %32 = vst.msk [vmem:[#allocation2 + $0x18] sm:$0xff] %vm28, 0.0
    %33 = vst.msk [vmem:[#allocation2 + $0x20] sm:$0xff] %vm28, 0.0
    %34 = vst.msk [vmem:[#allocation2 + $0x28] sm:$0xff] %vm28, 0.0
    %35 = vst.msk [vmem:[#allocation2 + $0x30] sm:$0xff] %vm28, 0.0
    %36 = vst.msk [vmem:[#allocation2 + $0x38] sm:$0xff] %vm28, 0.0
    %37 = vst.msk [vmem:[#allocation2 + $0x40] sm:$0xff] %vm28, 0.0
    %38 = vst.msk [vmem:[#allocation2 + $0x48] sm:$0xff] %vm28, 0.0
    %39 = vst.msk [vmem:[#allocation2 + $0x50] sm:$0xff] %vm28, 0.0
    %40 = vst.msk [vmem:[#allocation2 + $0x58] sm:$0xff] %vm28, 0.0
    %41 = vst.msk [vmem:[#allocation2 + $0x60] sm:$0xff] %vm28, 0.0
    %42 = vst.msk [vmem:[#allocation2 + $0x68] sm:$0xff] %vm28, 0.0
    %43 = vst.msk [vmem:[#allocation2 + $0x70] sm:$0xff] %vm28, 0.0
    %44 = vst.msk [vmem:[#allocation2 + $0x78] sm:$0xff] %vm28, 0.0
  $region29: #{_gcn_forward_impl.2} parent=0 // pred_fallthru
    _
  %s45 = smul.u32 0, 128
  %s46 = sshra.s32 %s45, 3
  %s47 = sand.u32 %s45, 7
  %s48 = smul.addr %s46, 4
  %s49 = scalar_lea.vmem %s1, %s48
  %v50 = vld [vmem:[%s49] sm:$0xf]
  %v51 = vld [vmem:[%s49 + $0x4] sm:$0xf]
  %v52 = vld [vmem:[%s49 + $0x8] sm:$0xf]
  %v53 = vld [vmem:[%s49 + $0xc] sm:$0xf]
  %v54 = vld [vmem:[%s49 + $0x10] sm:$0xf]
  %v55 = vld [vmem:[%s49 + $0x14] sm:$0xf]
  %v56 = vld [vmem:[%s49 + $0x18] sm:$0xf]
  %v57 = vld [vmem:[%s49 + $0x1c] sm:$0xf]
  %v58 = vld [vmem:[%s49 + $0x20] sm:$0xf]
  %v59 = vld [vmem:[%s49 + $0x24] sm:$0xf]
  %v60 = vld [vmem:[%s49 + $0x28] sm:$0xf]
  %v61 = vld [vmem:[%s49 + $0x2c] sm:$0xf]
  %v62 = vld [vmem:[%s49 + $0x30] sm:$0xf]
  %v63 = vld [vmem:[%s49 + $0x34] sm:$0xf]
  %v64 = vld [vmem:[%s49 + $0x38] sm:$0xf]
  %v65 = vld [vmem:[%s49 + $0x3c] sm:$0xf]
  %v66 = vld [vmem:[#allocation2] sm:$0xff]
  %v67 = vld [vmem:[#allocation2 + $0x8] sm:$0xff]
  %v68 = vld [vmem:[#allocation2 + $0x10] sm:$0xff]
  %v69 = vld [vmem:[#allocation2 + $0x18] sm:$0xff]
  %v70 = vld [vmem:[#allocation2 + $0x20] sm:$0xff]
  %v71 = vld [vmem:[#allocation2 + $0x28] sm:$0xff]
  %v72 = vld [vmem:[#allocation2 + $0x30] sm:$0xff]
  %v73 = vld [vmem:[#allocation2 + $0x38] sm:$0xff]
  %v74 = vld [vmem:[#allocation2 + $0x40] sm:$0xff]
  %v75 = vld [vmem:[#allocation2 + $0x48] sm:$0xff]
  %v76 = vld [vmem:[#allocation2 + $0x50] sm:$0xff]
  %v77 = vld [vmem:[#allocation2 + $0x58] sm:$0xff]
  %v78 = vld [vmem:[#allocation2 + $0x60] sm:$0xff]
  %v79 = vld [vmem:[#allocation2 + $0x68] sm:$0xff]
  %v80 = vld [vmem:[#allocation2 + $0x70] sm:$0xff]
  %v81 = vld [vmem:[#allocation2 + $0x78] sm:$0xff]
  %v82 = vld [vmem:[%s0] sm:$0x3]
  %v83 = vld [vmem:[%s0 + $0x2] sm:$0x3]
  %v84 = vld [vmem:[%s0 + $0x4] sm:$0x3]
  %v85 = vld [vmem:[%s0 + $0x6] sm:$0x3]
  %v86 = vld [vmem:[%s0 + $0x8] sm:$0x3]
  %v87 = vld [vmem:[%s0 + $0xa] sm:$0x3]
  %v88 = vld [vmem:[%s0 + $0xc] sm:$0x3]
  %v89 = vld [vmem:[%s0 + $0xe] sm:$0x3]
  %v90 = vld [vmem:[%s0 + $0x10] sm:$0x3]
  %v91 = vld [vmem:[%s0 + $0x12] sm:$0x3]
  %v92 = vld [vmem:[%s0 + $0x14] sm:$0x3]
  %v93 = vld [vmem:[%s0 + $0x16] sm:$0x3]
  %v94 = vld [vmem:[%s0 + $0x18] sm:$0x3]
  %v95 = vld [vmem:[%s0 + $0x1a] sm:$0x3]
  %v96 = vld [vmem:[%s0 + $0x1c] sm:$0x3]
  %v97 = vld [vmem:[%s0 + $0x1e] sm:$0x3]
  %v98 = vunpack.c.l.s8.bf16 %v82
  %v99 = vunpack.c.l.s8.bf16 %v83
  %v100 = vunpack.c.l.s8.bf16 %v84
  %v101 = vunpack.c.l.s8.bf16 %v85
  %v102 = vunpack.c.l.s8.bf16 %v86
  %v103 = vunpack.c.l.s8.bf16 %v87
  %v104 = vunpack.c.l.s8.bf16 %v88
  %v105 = vunpack.c.l.s8.bf16 %v89
  %v106 = vunpack.c.l.s8.bf16 %v90
  %v107 = vunpack.c.l.s8.bf16 %v91
  %v108 = vunpack.c.l.s8.bf16 %v92
  %v109 = vunpack.c.l.s8.bf16 %v93
  %v110 = vunpack.c.l.s8.bf16 %v94
  %v111 = vunpack.c.l.s8.bf16 %v95
  %v112 = vunpack.c.l.s8.bf16 %v96
  %v113 = vunpack.c.l.s8.bf16 %v97
  %v130 = vunpack.c.l.b16 %v98
  %v131 = vunpack.c.l.b16 %v99
  %v132 = vunpack.c.l.b16 %v100
  %v133 = vunpack.c.l.b16 %v101
  %v134 = vunpack.c.l.b16 %v102
  %v135 = vunpack.c.l.b16 %v103
  %v136 = vunpack.c.l.b16 %v104
  %v137 = vunpack.c.l.b16 %v105
  %v138 = vunpack.c.l.b16 %v106
  %v139 = vunpack.c.l.b16 %v107
  %v140 = vunpack.c.l.b16 %v108
  %v141 = vunpack.c.l.b16 %v109
  %v142 = vunpack.c.l.b16 %v110
  %v143 = vunpack.c.l.b16 %v111
  %v144 = vunpack.c.l.b16 %v112
  %v145 = vunpack.c.l.b16 %v113
  %v146 = vpack.c.b16 %v131, %v130
  %v147 = vpack.c.b16 %v133, %v132
  %v148 = vpack.c.b16 %v135, %v134
  %v149 = vpack.c.b16 %v137, %v136
  %v150 = vpack.c.b16 %v139, %v138
  %v151 = vpack.c.b16 %v141, %v140
  %v152 = vpack.c.b16 %v143, %v142
  %v153 = vpack.c.b16 %v145, %v144
  %v178 = vunpack.c.l.b16 %v50
  %v179 = vunpack.c.l.b16 %v51
  %v180 = vunpack.c.l.b16 %v52
  %v181 = vunpack.c.l.b16 %v53
  %v182 = vunpack.c.l.b16 %v54
  %v183 = vunpack.c.l.b16 %v55
  %v184 = vunpack.c.l.b16 %v56
  %v185 = vunpack.c.l.b16 %v57
  %v186 = vunpack.c.l.b16 %v58
  %v187 = vunpack.c.l.b16 %v59
  %v188 = vunpack.c.l.b16 %v60
  %v189 = vunpack.c.l.b16 %v61
  %v190 = vunpack.c.l.b16 %v62
  %v191 = vunpack.c.l.b16 %v63
  %v192 = vunpack.c.l.b16 %v64
  %v193 = vunpack.c.l.b16 %v65
  %v194 = vpack.c.b16 %v179, %v178
  %v195 = vpack.c.b16 %v181, %v180
  %v196 = vpack.c.b16 %v183, %v182
  %v197 = vpack.c.b16 %v185, %v184
  %v198 = vpack.c.b16 %v187, %v186
  %v199 = vpack.c.b16 %v189, %v188
  %v200 = vpack.c.b16 %v191, %v190
  %v201 = vpack.c.b16 %v193, %v192
  %210 = vmatprep.subr.bf16.mxu0 0
  %211 = vmatpush1.bf16.msra.mxu0 %v194
  %212 = vmatprep.subr.bf16.mxu0 0
  %213 = vmatpush1.bf16.msra.mxu0 %v195
  %214 = vmatprep.subr.bf16.mxu0 0
  %215 = vmatpush1.bf16.msra.mxu0 %v196
  %216 = vmatprep.subr.bf16.mxu0 0
  %217 = vmatpush1.bf16.msra.mxu0 %v197
  %218 = vmatprep.subr.bf16.mxu0 0
  %219 = vmatpush1.bf16.msra.mxu0 %v198
  %220 = vmatprep.subr.bf16.mxu0 0
  %221 = vmatpush1.bf16.msra.mxu0 %v199
  %222 = vmatprep.subr.bf16.mxu0 0
  %223 = vmatpush1.bf16.msra.mxu0 %v200
  %224 = vmatprep.subr.bf16.mxu0 0
  %225 = vmatpush1.bf16.msra.mxu0 %v201
  %226 = vmatprep.subr.bf16.mxu0 0
  %227 = vmatpush1.bf16.msra.mxu0 0
  %228 = vmatprep.subr.bf16.mxu0 0
  %229 = vmatpush1.bf16.msra.mxu0 0
  %230 = vmatprep.subr.bf16.mxu0 0
  %231 = vmatpush1.bf16.msra.mxu0 0
  %232 = vmatprep.subr.bf16.mxu0 0
  %233 = vmatpush1.bf16.msra.mxu0 0
  %234 = vmatprep.subr.bf16.mxu0 0
  %235 = vmatpush1.bf16.msra.mxu0 0
  %236 = vmatprep.subr.bf16.mxu0 0
  %237 = vmatpush1.bf16.msra.mxu0 0
  %238 = vmatprep.subr.bf16.mxu0 0
  %239 = vmatpush1.bf16.msra.mxu0 0
  %240 = vmatprep.subr.bf16.mxu0 0
  %241 = vmatpush1.bf16.msra.mxu0 0
  %242 = vmatprep.mubr.bf16.mxu0 0
  %243 = vmatmul.mubr.bf16.gmra.mrb[0].mxu0 %v146
  %v244 = vpop.f32.mrb[0].mxu0
  %v245 = vadd.f32 0.0, %v244
  %v246 = vpop.f32.mrb[0].mxu0
  %v247 = vpop.f32.mrb[0].mxu0
  %v248 = vadd.f32 0.0, %v247
  %v249 = vpop.f32.mrb[0].mxu0
  %250 = vmatprep.mubr.bf16.mxu0 0
  %251 = vmatmul.mubr.bf16.gmra.mrb[0].mxu0 %v147
  %v252 = vpop.f32.mrb[0].mxu0
  %v253 = vadd.f32 0.0, %v252
  %v254 = vpop.f32.mrb[0].mxu0
  %v255 = vpop.f32.mrb[0].mxu0
  %v256 = vadd.f32 0.0, %v255
  %v257 = vpop.f32.mrb[0].mxu0
  %258 = vmatprep.mubr.bf16.mxu0 0
  %259 = vmatmul.mubr.bf16.gmra.mrb[0].mxu0 %v148
  %v260 = vpop.f32.mrb[0].mxu0
  %v261 = vadd.f32 0.0, %v260
  %v262 = vpop.f32.mrb[0].mxu0
  %v263 = vpop.f32.mrb[0].mxu0
  %v264 = vadd.f32 0.0, %v263
  %v265 = vpop.f32.mrb[0].mxu0
  %266 = vmatprep.mubr.bf16.mxu0 0
  %267 = vmatmul.mubr.bf16.gmra.mrb[0].mxu0 %v149
  %v268 = vpop.f32.mrb[0].mxu0
  %v269 = vadd.f32 0.0, %v268
  %v270 = vpop.f32.mrb[0].mxu0
  %v271 = vpop.f32.mrb[0].mxu0
  %v272 = vadd.f32 0.0, %v271
  %v273 = vpop.f32.mrb[0].mxu0
  %274 = vmatprep.mubr.bf16.mxu0 0
  %275 = vmatmul.mubr.bf16.gmra.mrb[0].mxu0 %v150
  %v276 = vpop.f32.mrb[0].mxu0
  %v277 = vadd.f32 0.0, %v276
  %v278 = vpop.f32.mrb[0].mxu0
  %v279 = vpop.f32.mrb[0].mxu0
  %v280 = vadd.f32 0.0, %v279
  %v281 = vpop.f32.mrb[0].mxu0
  %282 = vmatprep.mubr.bf16.mxu0 0
  %283 = vmatmul.mubr.bf16.gmra.mrb[0].mxu0 %v151
  %v284 = vpop.f32.mrb[0].mxu0
  %v285 = vadd.f32 0.0, %v284
  %v286 = vpop.f32.mrb[0].mxu0
  %v287 = vpop.f32.mrb[0].mxu0
  %v288 = vadd.f32 0.0, %v287
  %v289 = vpop.f32.mrb[0].mxu0
  %290 = vmatprep.mubr.bf16.mxu0 0
  %291 = vmatmul.mubr.bf16.gmra.mrb[0].mxu0 %v152
  %v292 = vpop.f32.mrb[0].mxu0
  %v293 = vadd.f32 0.0, %v292
  %v294 = vpop.f32.mrb[0].mxu0
  %v295 = vpop.f32.mrb[0].mxu0
  %v296 = vadd.f32 0.0, %v295
  %v297 = vpop.f32.mrb[0].mxu0
  %298 = vmatprep.mubr.bf16.mxu0 0
  %299 = vmatmul.mubr.bf16.gmra.mrb[0].mxu0 %v153
  %v300 = vpop.f32.mrb[0].mxu0
  %v301 = vadd.f32 0.0, %v300
  %v302 = vpop.f32.mrb[0].mxu0
  %v303 = vpop.f32.mrb[0].mxu0
  %v304 = vadd.f32 0.0, %v303
  %v305 = vpop.f32.mrb[0].mxu0
  %306 = vdwg.mxu0
  %v307 = vadd.f32 %v66, %v245
  %v308 = vadd.f32 %v67, %v248
  %v309 = vadd.f32 %v68, %v253
  %v310 = vadd.f32 %v69, %v256
  %v311 = vadd.f32 %v70, %v261
  %v312 = vadd.f32 %v71, %v264
  %v313 = vadd.f32 %v72, %v269
  %v314 = vadd.f32 %v73, %v272
  %v315 = vadd.f32 %v74, %v277
  %v316 = vadd.f32 %v75, %v280
  %v317 = vadd.f32 %v76, %v285
  %v318 = vadd.f32 %v77, %v288
  %v319 = vadd.f32 %v78, %v293
  %v320 = vadd.f32 %v79, %v296
  %v321 = vadd.f32 %v80, %v301
  %v322 = vadd.f32 %v81, %v304
  %vm323 = vcmask 64512
  %324 = vst.msk [vmem:[#allocation2] sm:$0xff] %vm323, %v307
  %325 = vst.msk [vmem:[#allocation2 + $0x8] sm:$0xff] %vm323, %v308
  %326 = vst.msk [vmem:[#allocation2 + $0x10] sm:$0xff] %vm323, %v309
  %327 = vst.msk [vmem:[#allocation2 + $0x18] sm:$0xff] %vm323, %v310
  %328 = vst.msk [vmem:[#allocation2 + $0x20] sm:$0xff] %vm323, %v311
  %329 = vst.msk [vmem:[#allocation2 + $0x28] sm:$0xff] %vm323, %v312
  %330 = vst.msk [vmem:[#allocation2 + $0x30] sm:$0xff] %vm323, %v313
  %331 = vst.msk [vmem:[#allocation2 + $0x38] sm:$0xff] %vm323, %v314
  %332 = vst.msk [vmem:[#allocation2 + $0x40] sm:$0xff] %vm323, %v315
  %333 = vst.msk [vmem:[#allocation2 + $0x48] sm:$0xff] %vm323, %v316
  %334 = vst.msk [vmem:[#allocation2 + $0x50] sm:$0xff] %vm323, %v317
  %335 = vst.msk [vmem:[#allocation2 + $0x58] sm:$0xff] %vm323, %v318
  %336 = vst.msk [vmem:[#allocation2 + $0x60] sm:$0xff] %vm323, %v319
  %337 = vst.msk [vmem:[#allocation2 + $0x68] sm:$0xff] %vm323, %v320
  %338 = vst.msk [vmem:[#allocation2 + $0x70] sm:$0xff] %vm323, %v321
  %339 = vst.msk [vmem:[#allocation2 + $0x78] sm:$0xff] %vm323, %v322
  // Predicated region
  $region30: #{_gcn_forward_impl.2} parent=0 // pred_check
    %p340 = pneg %p24
  $region31: #{_gcn_forward_impl.2} parent=0 // pred_check_branch
    %342 = sbr.rel (%p340) target = $region33
  $region32: #{_gcn_forward_impl.2} parent=0 // pred_region
    %v343 = vld [vmem:[%s2] sm:$0xff]
    %v344 = vld [vmem:[%s2 + $0x8] sm:$0xff]
    %v345 = vld [vmem:[%s2 + $0x10] sm:$0xff]
    %v346 = vld [vmem:[%s2 + $0x18] sm:$0xff]
    %v347 = vld [vmem:[%s2 + $0x20] sm:$0xff]
    %v348 = vld [vmem:[%s2 + $0x28] sm:$0xff]
    %v349 = vld [vmem:[%s2 + $0x30] sm:$0xff]
    %v350 = vld [vmem:[%s2 + $0x38] sm:$0xff]
    %v351 = vld [vmem:[%s2 + $0x40] sm:$0xff]
    %v352 = vld [vmem:[%s2 + $0x48] sm:$0xff]
    %v353 = vld [vmem:[%s2 + $0x50] sm:$0xff]
    %v354 = vld [vmem:[%s2 + $0x58] sm:$0xff]
    %v355 = vld [vmem:[%s2 + $0x60] sm:$0xff]
    %v356 = vld [vmem:[%s2 + $0x68] sm:$0xff]
    %v357 = vld [vmem:[%s2 + $0x70] sm:$0xff]
    %v358 = vld [vmem:[%s2 + $0x78] sm:$0xff]
    %v359 = vld [vmem:[#allocation2] sm:$0xff]
    %v360 = vld [vmem:[#allocation2 + $0x8] sm:$0xff]
    %v361 = vld [vmem:[#allocation2 + $0x10] sm:$0xff]
    %v362 = vld [vmem:[#allocation2 + $0x18] sm:$0xff]
    %v363 = vld [vmem:[#allocation2 + $0x20] sm:$0xff]
    %v364 = vld [vmem:[#allocation2 + $0x28] sm:$0xff]
    %v365 = vld [vmem:[#allocation2 + $0x30] sm:$0xff]
    %v366 = vld [vmem:[#allocation2 + $0x38] sm:$0xff]
    %v367 = vld [vmem:[#allocation2 + $0x40] sm:$0xff]
    %v368 = vld [vmem:[#allocation2 + $0x48] sm:$0xff]
    %v369 = vld [vmem:[#allocation2 + $0x50] sm:$0xff]
    %v370 = vld [vmem:[#allocation2 + $0x58] sm:$0xff]
    %v371 = vld [vmem:[#allocation2 + $0x60] sm:$0xff]
    %v372 = vld [vmem:[#allocation2 + $0x68] sm:$0xff]
    %v373 = vld [vmem:[#allocation2 + $0x70] sm:$0xff]
    %v374 = vld [vmem:[#allocation2 + $0x78] sm:$0xff]
    %376 = vset.pattern.permute.xlu0 0
    %377 = vperm.xlu0 %376, %v343
    %v378 = vpop.permute.xlu0 %377
    %381 = vset.pattern.permute.xlu0 0
    %382 = vperm.xlu0 %381, %v344
    %v383 = vpop.permute.xlu0 %382
    %386 = vset.pattern.permute.xlu0 0
    %387 = vperm.xlu0 %386, %v345
    %v388 = vpop.permute.xlu0 %387
    %391 = vset.pattern.permute.xlu0 0
    %392 = vperm.xlu0 %391, %v346
    %v393 = vpop.permute.xlu0 %392
    %396 = vset.pattern.permute.xlu0 0
    %397 = vperm.xlu0 %396, %v347
    %v398 = vpop.permute.xlu0 %397
    %401 = vset.pattern.permute.xlu0 0
    %402 = vperm.xlu0 %401, %v348
    %v403 = vpop.permute.xlu0 %402
    %406 = vset.pattern.permute.xlu0 0
    %407 = vperm.xlu0 %406, %v349
    %v408 = vpop.permute.xlu0 %407
    %411 = vset.pattern.permute.xlu0 0
    %412 = vperm.xlu0 %411, %v350
    %v413 = vpop.permute.xlu0 %412
    %416 = vset.pattern.permute.xlu0 0
    %417 = vperm.xlu0 %416, %v351
    %v418 = vpop.permute.xlu0 %417
    %421 = vset.pattern.permute.xlu0 0
    %422 = vperm.xlu0 %421, %v352
    %v423 = vpop.permute.xlu0 %422
    %426 = vset.pattern.permute.xlu0 0
    %427 = vperm.xlu0 %426, %v353
    %v428 = vpop.permute.xlu0 %427
    %431 = vset.pattern.permute.xlu0 0
    %432 = vperm.xlu0 %431, %v354
    %v433 = vpop.permute.xlu0 %432
    %436 = vset.pattern.permute.xlu0 0
    %437 = vperm.xlu0 %436, %v355
    %v438 = vpop.permute.xlu0 %437
    %441 = vset.pattern.permute.xlu0 0
    %442 = vperm.xlu0 %441, %v356
    %v443 = vpop.permute.xlu0 %442
    %446 = vset.pattern.permute.xlu0 0
    %447 = vperm.xlu0 %446, %v357
    %v448 = vpop.permute.xlu0 %447
    %451 = vset.pattern.permute.xlu0 0
    %452 = vperm.xlu0 %451, %v358
    %v453 = vpop.permute.xlu0 %452
    %v455 = vmul.f32 %v378, %v359
    %v456 = vmul.f32 %v383, %v360
    %v457 = vmul.f32 %v388, %v361
    %v458 = vmul.f32 %v393, %v362
    %v459 = vmul.f32 %v398, %v363
    %v460 = vmul.f32 %v403, %v364
    %v461 = vmul.f32 %v408, %v365
    %v462 = vmul.f32 %v413, %v366
    %v463 = vmul.f32 %v418, %v367
    %v464 = vmul.f32 %v423, %v368
    %v465 = vmul.f32 %v428, %v369
    %v466 = vmul.f32 %v433, %v370
    %v467 = vmul.f32 %v438, %v371
    %v468 = vmul.f32 %v443, %v372
    %v469 = vmul.f32 %v448, %v373
    %v470 = vmul.f32 %v453, %v374
    %v471 = vld [vmem:[%s3] sm:$0xff]
    %v472 = vld [vmem:[%s4] sm:$0x1]
    %v474 = vlaneseq
    %v475 = vshrl.u32 %v474, 7
    %v476 = vsub.s32 0, %v475
    %v477 = vrot.slane %v472, %v476
    %v480 = vsel %vm323, %v455, 0
    %v483 = vsel %vm323, %v456, 0
    %v486 = vsel %vm323, %v457, 0
    %v489 = vsel %vm323, %v458, 0
    %v492 = vsel %vm323, %v459, 0
    %v495 = vsel %vm323, %v460, 0
    %v498 = vsel %vm323, %v461, 0
    %v501 = vsel %vm323, %v462, 0
    %v504 = vsel %vm323, %v463, 0
    %v507 = vsel %vm323, %v464, 0
    %v510 = vsel %vm323, %v465, 0
    %v513 = vsel %vm323, %v466, 0
    %v516 = vsel %vm323, %v467, 0
    %v519 = vsel %vm323, %v468, 0
    %v522 = vsel %vm323, %v469, 0
    %v525 = vsel %vm323, %v470, 0
    %527 = vmatprep.subr.mxu0 0.0
    %528 = vmatpush1.msra.mxu0 %v471
    %529 = vmatprep.subr.mxu0 0.0
    %530 = vmatpush1.msra.mxu0 0.0
    %531 = vmatprep.subr.mxu0 0.0
    %532 = vmatpush1.msra.mxu0 0.0
    %533 = vmatprep.subr.mxu0 0.0
    %534 = vmatpush1.msra.mxu0 0.0
    %535 = vmatprep.subr.mxu0 0.0
    %536 = vmatpush1.msra.mxu0 0.0
    %537 = vmatprep.subr.mxu0 0.0
    %538 = vmatpush1.msra.mxu0 0.0
    %539 = vmatprep.subr.mxu0 0.0
    %540 = vmatpush1.msra.mxu0 0.0
    %541 = vmatprep.subr.mxu0 0.0
    %542 = vmatpush1.msra.mxu0 0.0
    %543 = vmatprep.subr.mxu0 0.0
    %544 = vmatpush1.msra.mxu0 0.0
    %545 = vmatprep.subr.mxu0 0.0
    %546 = vmatpush1.msra.mxu0 0.0
    %547 = vmatprep.subr.mxu0 0.0
    %548 = vmatpush1.msra.mxu0 0.0
    %549 = vmatprep.subr.mxu0 0.0
    %550 = vmatpush1.msra.mxu0 0.0
    %551 = vmatprep.subr.mxu0 0.0
    %552 = vmatpush1.msra.mxu0 0.0
    %553 = vmatprep.subr.mxu0 0.0
    %554 = vmatpush1.msra.mxu0 0.0
    %555 = vmatprep.subr.mxu0 0.0
    %556 = vmatpush1.msra.mxu0 0.0
    %557 = vmatprep.subr.mxu0 0.0
    %558 = vmatpush1.msra.mxu0 0.0
    %559 = vmatprep.subr.mxu0 0.0
    %560 = vmatpush1.msra.mxu0 0.0
    %561 = vmatprep.subr.mxu0 0.0
    %562 = vmatpush1.msra.mxu0 0.0
    %563 = vmatprep.subr.mxu0 0.0
    %564 = vmatpush1.msra.mxu0 0.0
    %565 = vmatprep.subr.mxu0 0.0
    %566 = vmatpush1.msra.mxu0 0.0
    %567 = vmatprep.subr.mxu0 0.0
    %568 = vmatpush1.msra.mxu0 0.0
    %569 = vmatprep.subr.mxu0 0.0
    %570 = vmatpush1.msra.mxu0 0.0
    %571 = vmatprep.subr.mxu0 0.0
    %572 = vmatpush1.msra.mxu0 0.0
    %573 = vmatprep.subr.mxu0 0.0
    %574 = vmatpush1.msra.mxu0 0.0
    %575 = vmatprep.subr.mxu0 0.0
    %576 = vmatpush1.msra.mxu0 0.0
    %577 = vmatprep.subr.mxu0 0.0
    %578 = vmatpush1.msra.mxu0 0.0
    %579 = vmatprep.subr.mxu0 0.0
    %580 = vmatpush1.msra.mxu0 0.0
    %581 = vmatprep.subr.mxu0 0.0
    %582 = vmatpush1.msra.mxu0 0.0
    %583 = vmatprep.subr.mxu0 0.0
    %584 = vmatpush1.msra.mxu0 0.0
    %585 = vmatprep.subr.mxu0 0.0
    %586 = vmatpush1.msra.mxu0 0.0
    %587 = vmatprep.subr.mxu0 0.0
    %588 = vmatpush1.msra.mxu0 0.0
    %589 = vmatprep.subr.mxu0 0.0
    %590 = vmatpush1.msra.mxu0 0.0
    %591 = vmatprep.mubr.f32.mxu0 0.0
    %592 = vmatmul.mubr.f32.gmra.mrb[0].mxu0 %v480
    %v593 = vpop.f32.mrb[0].mxu0
    %v594 = vadd.f32 %v477, %v593
    %v595 = vpop.f32.mrb[0].mxu0
    %596 = vmatprep.mubr.f32.mxu0 0.0
    %597 = vmatmul.mubr.f32.gmra.mrb[0].mxu0 %v483
    %v598 = vpop.f32.mrb[0].mxu0
    %v599 = vadd.f32 %v477, %v598
    %v600 = vpop.f32.mrb[0].mxu0
    %601 = vmatprep.mubr.f32.mxu0 0.0
    %602 = vmatmul.mubr.f32.gmra.mrb[0].mxu0 %v486
    %v603 = vpop.f32.mrb[0].mxu0
    %v604 = vadd.f32 %v477, %v603
    %v605 = vpop.f32.mrb[0].mxu0
    %606 = vmatprep.mubr.f32.mxu0 0.0
    %607 = vmatmul.mubr.f32.gmra.mrb[0].mxu0 %v489
    %v608 = vpop.f32.mrb[0].mxu0
    %v609 = vadd.f32 %v477, %v608
    %v610 = vpop.f32.mrb[0].mxu0
    %611 = vmatprep.mubr.f32.mxu0 0.0
    %612 = vmatmul.mubr.f32.gmra.mrb[0].mxu0 %v492
    %v613 = vpop.f32.mrb[0].mxu0
    %v614 = vadd.f32 %v477, %v613
    %v615 = vpop.f32.mrb[0].mxu0
    %616 = vmatprep.mubr.f32.mxu0 0.0
    %617 = vmatmul.mubr.f32.gmra.mrb[0].mxu0 %v495
    %v618 = vpop.f32.mrb[0].mxu0
    %v619 = vadd.f32 %v477, %v618
    %v620 = vpop.f32.mrb[0].mxu0
    %621 = vmatprep.mubr.f32.mxu0 0.0
    %622 = vmatmul.mubr.f32.gmra.mrb[0].mxu0 %v498
    %v623 = vpop.f32.mrb[0].mxu0
    %v624 = vadd.f32 %v477, %v623
    %v625 = vpop.f32.mrb[0].mxu0
    %626 = vmatprep.mubr.f32.mxu0 0.0
    %627 = vmatmul.mubr.f32.gmra.mrb[0].mxu0 %v501
    %v628 = vpop.f32.mrb[0].mxu0
    %v629 = vadd.f32 %v477, %v628
    %v630 = vpop.f32.mrb[0].mxu0
    %631 = vmatprep.mubr.f32.mxu0 0.0
    %632 = vmatmul.mubr.f32.gmra.mrb[0].mxu0 %v504
    %v633 = vpop.f32.mrb[0].mxu0
    %v634 = vadd.f32 %v477, %v633
    %v635 = vpop.f32.mrb[0].mxu0
    %636 = vmatprep.mubr.f32.mxu0 0.0
    %637 = vmatmul.mubr.f32.gmra.mrb[0].mxu0 %v507
    %v638 = vpop.f32.mrb[0].mxu0
    %v639 = vadd.f32 %v477, %v638
    %v640 = vpop.f32.mrb[0].mxu0
    %641 = vmatprep.mubr.f32.mxu0 0.0
    %642 = vmatmul.mubr.f32.gmra.mrb[0].mxu0 %v510
    %v643 = vpop.f32.mrb[0].mxu0
    %v644 = vadd.f32 %v477, %v643
    %v645 = vpop.f32.mrb[0].mxu0
    %646 = vmatprep.mubr.f32.mxu0 0.0
    %647 = vmatmul.mubr.f32.gmra.mrb[0].mxu0 %v513
    %v648 = vpop.f32.mrb[0].mxu0
    %v649 = vadd.f32 %v477, %v648
    %v650 = vpop.f32.mrb[0].mxu0
    %651 = vmatprep.mubr.f32.mxu0 0.0
    %652 = vmatmul.mubr.f32.gmra.mrb[0].mxu0 %v516
    %v653 = vpop.f32.mrb[0].mxu0
    %v654 = vadd.f32 %v477, %v653
    %v655 = vpop.f32.mrb[0].mxu0
    %656 = vmatprep.mubr.f32.mxu0 0.0
    %657 = vmatmul.mubr.f32.gmra.mrb[0].mxu0 %v519
    %v658 = vpop.f32.mrb[0].mxu0
    %v659 = vadd.f32 %v477, %v658
    %v660 = vpop.f32.mrb[0].mxu0
    %661 = vmatprep.mubr.f32.mxu0 0.0
    %662 = vmatmul.mubr.f32.gmra.mrb[0].mxu0 %v522
    %v663 = vpop.f32.mrb[0].mxu0
    %v664 = vadd.f32 %v477, %v663
    %v665 = vpop.f32.mrb[0].mxu0
    %666 = vmatprep.mubr.f32.mxu0 0.0
    %667 = vmatmul.mubr.f32.gmra.mrb[0].mxu0 %v525
    %v668 = vpop.f32.mrb[0].mxu0
    %v669 = vadd.f32 %v477, %v668
    %v670 = vpop.f32.mrb[0].mxu0
    %671 = vdwg.mxu0
    %v672 = vtanh.pop %v594
    %v673 = vtanh.pop %v599
    %v674 = vtanh.pop %v604
    %v675 = vtanh.pop %v609
    %v676 = vtanh.pop %v614
    %v677 = vtanh.pop %v619
    %v678 = vtanh.pop %v624
    %v679 = vtanh.pop %v629
    %v680 = vtanh.pop %v634
    %v681 = vtanh.pop %v639
    %v682 = vtanh.pop %v644
    %v683 = vtanh.pop %v649
    %v684 = vtanh.pop %v654
    %v685 = vtanh.pop %v659
    %v686 = vtanh.pop %v664
    %v687 = vtanh.pop %v669
    %v688 = vld [vmem:[%s5] sm:$0xff]
    %v689 = vld [vmem:[%s5 + $0x8] sm:$0xff]
    %v690 = vld [vmem:[%s5 + $0x10] sm:$0xff]
    %v691 = vld [vmem:[%s5 + $0x18] sm:$0xff]
    %vm692 = vcmask 261120
    %v694 = vsel %vm692, %v672, 0
    %v697 = vsel %vm692, %v673, 0
    %v700 = vsel %vm692, %v674, 0
    %v703 = vsel %vm692, %v675, 0
    %v706 = vsel %vm692, %v676, 0
    %v709 = vsel %vm692, %v677, 0
    %v712 = vsel %vm692, %v678, 0
    %v715 = vsel %vm692, %v679, 0
    %v718 = vsel %vm692, %v680, 0
    %v721 = vsel %vm692, %v681, 0
    %v724 = vsel %vm692, %v682, 0
    %v727 = vsel %vm692, %v683, 0
    %v730 = vsel %vm692, %v684, 0
    %v733 = vsel %vm692, %v685, 0
    %v736 = vsel %vm692, %v686, 0
    %v739 = vsel %vm692, %v687, 0
    %741 = vmatprep.subr.mxu0 0.0
    %742 = vmatpush1.msra.mxu0 %v688
    %743 = vmatprep.subr.mxu0 0.0
    %744 = vmatpush1.msra.mxu0 %v689
    %745 = vmatprep.subr.mxu0 0.0
    %746 = vmatpush1.msra.mxu0 %v690
    %747 = vmatprep.subr.mxu0 0.0
    %748 = vmatpush1.msra.mxu0 %v691
    %749 = vmatprep.subr.mxu0 0.0
    %750 = vmatpush1.msra.mxu0 0.0
    %751 = vmatprep.subr.mxu0 0.0
    %752 = vmatpush1.msra.mxu0 0.0
    %753 = vmatprep.subr.mxu0 0.0
    %754 = vmatpush1.msra.mxu0 0.0
    %755 = vmatprep.subr.mxu0 0.0
    %756 = vmatpush1.msra.mxu0 0.0
    %757 = vmatprep.subr.mxu0 0.0
    %758 = vmatpush1.msra.mxu0 0.0
    %759 = vmatprep.subr.mxu0 0.0
    %760 = vmatpush1.msra.mxu0 0.0
    %761 = vmatprep.subr.mxu0 0.0
    %762 = vmatpush1.msra.mxu0 0.0
    %763 = vmatprep.subr.mxu0 0.0
    %764 = vmatpush1.msra.mxu0 0.0
    %765 = vmatprep.subr.mxu0 0.0
    %766 = vmatpush1.msra.mxu0 0.0
    %767 = vmatprep.subr.mxu0 0.0
    %768 = vmatpush1.msra.mxu0 0.0
    %769 = vmatprep.subr.mxu0 0.0
    %770 = vmatpush1.msra.mxu0 0.0
    %771 = vmatprep.subr.mxu0 0.0
    %772 = vmatpush1.msra.mxu0 0.0
    %773 = vmatprep.subr.mxu0 0.0
    %774 = vmatpush1.msra.mxu0 0.0
    %775 = vmatprep.subr.mxu0 0.0
    %776 = vmatpush1.msra.mxu0 0.0
    %777 = vmatprep.subr.mxu0 0.0
    %778 = vmatpush1.msra.mxu0 0.0
    %779 = vmatprep.subr.mxu0 0.0
    %780 = vmatpush1.msra.mxu0 0.0
    %781 = vmatprep.subr.mxu0 0.0
    %782 = vmatpush1.msra.mxu0 0.0
    %783 = vmatprep.subr.mxu0 0.0
    %784 = vmatpush1.msra.mxu0 0.0
    %785 = vmatprep.subr.mxu0 0.0
    %786 = vmatpush1.msra.mxu0 0.0
    %787 = vmatprep.subr.mxu0 0.0
    %788 = vmatpush1.msra.mxu0 0.0
    %789 = vmatprep.subr.mxu0 0.0
    %790 = vmatpush1.msra.mxu0 0.0
    %791 = vmatprep.subr.mxu0 0.0
    %792 = vmatpush1.msra.mxu0 0.0
    %793 = vmatprep.subr.mxu0 0.0
    %794 = vmatpush1.msra.mxu0 0.0
    %795 = vmatprep.subr.mxu0 0.0
    %796 = vmatpush1.msra.mxu0 0.0
    %797 = vmatprep.subr.mxu0 0.0
    %798 = vmatpush1.msra.mxu0 0.0
    %799 = vmatprep.subr.mxu0 0.0
    %800 = vmatpush1.msra.mxu0 0.0
    %801 = vmatprep.subr.mxu0 0.0
    %802 = vmatpush1.msra.mxu0 0.0
    %803 = vmatprep.subr.mxu0 0.0
    %804 = vmatpush1.msra.mxu0 0.0
    %805 = vmatprep.mubr.f32.mxu0 0.0
    %806 = vmatmul.mubr.f32.gmra.mrb[0].mxu0 %v694
    %v807 = vpop.f32.mrb[0].mxu0
    %v808 = vadd.f32 0.0, %v807
    %v809 = vpop.f32.mrb[0].mxu0
    %810 = vmatprep.mubr.f32.mxu0 0.0
    %811 = vmatmul.mubr.f32.gmra.mrb[0].mxu0 %v697
    %v812 = vpop.f32.mrb[0].mxu0
    %v813 = vadd.f32 0.0, %v812
    %v814 = vpop.f32.mrb[0].mxu0
    %815 = vmatprep.mubr.f32.mxu0 0.0
    %816 = vmatmul.mubr.f32.gmra.mrb[0].mxu0 %v700
    %v817 = vpop.f32.mrb[0].mxu0
    %v818 = vadd.f32 0.0, %v817
    %v819 = vpop.f32.mrb[0].mxu0
    %820 = vmatprep.mubr.f32.mxu0 0.0
    %821 = vmatmul.mubr.f32.gmra.mrb[0].mxu0 %v703
    %v822 = vpop.f32.mrb[0].mxu0
    %v823 = vadd.f32 0.0, %v822
    %v824 = vpop.f32.mrb[0].mxu0
    %825 = vmatprep.mubr.f32.mxu0 0.0
    %826 = vmatmul.mubr.f32.gmra.mrb[0].mxu0 %v706
    %v827 = vpop.f32.mrb[0].mxu0
    %v828 = vadd.f32 0.0, %v827
    %v829 = vpop.f32.mrb[0].mxu0
    %830 = vmatprep.mubr.f32.mxu0 0.0
    %831 = vmatmul.mubr.f32.gmra.mrb[0].mxu0 %v709
    %v832 = vpop.f32.mrb[0].mxu0
    %v833 = vadd.f32 0.0, %v832
    %v834 = vpop.f32.mrb[0].mxu0
    %835 = vmatprep.mubr.f32.mxu0 0.0
    %836 = vmatmul.mubr.f32.gmra.mrb[0].mxu0 %v712
    %v837 = vpop.f32.mrb[0].mxu0
    %v838 = vadd.f32 0.0, %v837
    %v839 = vpop.f32.mrb[0].mxu0
    %840 = vmatprep.mubr.f32.mxu0 0.0
    %841 = vmatmul.mubr.f32.gmra.mrb[0].mxu0 %v715
    %v842 = vpop.f32.mrb[0].mxu0
    %v843 = vadd.f32 0.0, %v842
    %v844 = vpop.f32.mrb[0].mxu0
    %845 = vmatprep.mubr.f32.mxu0 0.0
    %846 = vmatmul.mubr.f32.gmra.mrb[0].mxu0 %v718
    %v847 = vpop.f32.mrb[0].mxu0
    %v848 = vadd.f32 0.0, %v847
    %v849 = vpop.f32.mrb[0].mxu0
    %850 = vmatprep.mubr.f32.mxu0 0.0
    %851 = vmatmul.mubr.f32.gmra.mrb[0].mxu0 %v721
    %v852 = vpop.f32.mrb[0].mxu0
    %v853 = vadd.f32 0.0, %v852
    %v854 = vpop.f32.mrb[0].mxu0
    %855 = vmatprep.mubr.f32.mxu0 0.0
    %856 = vmatmul.mubr.f32.gmra.mrb[0].mxu0 %v724
    %v857 = vpop.f32.mrb[0].mxu0
    %v858 = vadd.f32 0.0, %v857
    %v859 = vpop.f32.mrb[0].mxu0
    %860 = vmatprep.mubr.f32.mxu0 0.0
    %861 = vmatmul.mubr.f32.gmra.mrb[0].mxu0 %v727
    %v862 = vpop.f32.mrb[0].mxu0
    %v863 = vadd.f32 0.0, %v862
    %v864 = vpop.f32.mrb[0].mxu0
    %865 = vmatprep.mubr.f32.mxu0 0.0
    %866 = vmatmul.mubr.f32.gmra.mrb[0].mxu0 %v730
    %v867 = vpop.f32.mrb[0].mxu0
    %v868 = vadd.f32 0.0, %v867
    %v869 = vpop.f32.mrb[0].mxu0
    %870 = vmatprep.mubr.f32.mxu0 0.0
    %871 = vmatmul.mubr.f32.gmra.mrb[0].mxu0 %v733
    %v872 = vpop.f32.mrb[0].mxu0
    %v873 = vadd.f32 0.0, %v872
    %v874 = vpop.f32.mrb[0].mxu0
    %875 = vmatprep.mubr.f32.mxu0 0.0
    %876 = vmatmul.mubr.f32.gmra.mrb[0].mxu0 %v736
    %v877 = vpop.f32.mrb[0].mxu0
    %v878 = vadd.f32 0.0, %v877
    %v879 = vpop.f32.mrb[0].mxu0
    %880 = vmatprep.mubr.f32.mxu0 0.0
    %881 = vmatmul.mubr.f32.gmra.mrb[0].mxu0 %v739
    %v882 = vpop.f32.mrb[0].mxu0
    %v883 = vadd.f32 0.0, %v882
    %v884 = vpop.f32.mrb[0].mxu0
    %885 = vdwg.mxu0
    %v886 = vmul.f32 %v378, %v808
    %v887 = vmul.f32 %v383, %v813
    %v888 = vmul.f32 %v388, %v818
    %v889 = vmul.f32 %v393, %v823
    %v890 = vmul.f32 %v398, %v828
    %v891 = vmul.f32 %v403, %v833
    %v892 = vmul.f32 %v408, %v838
    %v893 = vmul.f32 %v413, %v843
    %v894 = vmul.f32 %v418, %v848
    %v895 = vmul.f32 %v423, %v853
    %v896 = vmul.f32 %v428, %v858
    %v897 = vmul.f32 %v433, %v863
    %v898 = vmul.f32 %v438, %v868
    %v899 = vmul.f32 %v443, %v873
    %v900 = vmul.f32 %v448, %v878
    %v901 = vmul.f32 %v453, %v883
    %v902 = vpack.c.bf16 %v887, %v886
    %v903 = vpack.c.bf16 %v889, %v888
    %v904 = vpack.c.bf16 %v891, %v890
    %v905 = vpack.c.bf16 %v893, %v892
    %v906 = vpack.c.bf16 %v895, %v894
    %v907 = vpack.c.bf16 %v897, %v896
    %v908 = vpack.c.bf16 %v899, %v898
    %v909 = vpack.c.bf16 %v901, %v900
    %v918 = vunpack.c.l.b16 %v902
    %v919 = vunpack.c.h.b16 %v902
    %v920 = vunpack.c.l.b16 %v903
    %v921 = vunpack.c.h.b16 %v903
    %v922 = vunpack.c.l.b16 %v904
    %v923 = vunpack.c.h.b16 %v904
    %v924 = vunpack.c.l.b16 %v905
    %v925 = vunpack.c.h.b16 %v905
    %v926 = vunpack.c.l.b16 %v906
    %v927 = vunpack.c.h.b16 %v906
    %v928 = vunpack.c.l.b16 %v907
    %v929 = vunpack.c.h.b16 %v907
    %v930 = vunpack.c.l.b16 %v908
    %v931 = vunpack.c.h.b16 %v908
    %v932 = vunpack.c.l.b16 %v909
    %v933 = vunpack.c.h.b16 %v909
    %v934 = vpack.c.b16 %v918, %v918
    %v935 = vpack.c.b16 %v919, %v919
    %v936 = vpack.c.b16 %v920, %v920
    %v937 = vpack.c.b16 %v921, %v921
    %v938 = vpack.c.b16 %v922, %v922
    %v939 = vpack.c.b16 %v923, %v923
    %v940 = vpack.c.b16 %v924, %v924
    %v941 = vpack.c.b16 %v925, %v925
    %v942 = vpack.c.b16 %v926, %v926
    %v943 = vpack.c.b16 %v927, %v927
    %v944 = vpack.c.b16 %v928, %v928
    %v945 = vpack.c.b16 %v929, %v929
    %v946 = vpack.c.b16 %v930, %v930
    %v947 = vpack.c.b16 %v931, %v931
    %v948 = vpack.c.b16 %v932, %v932
    %v949 = vpack.c.b16 %v933, %v933
    %966 = vst [vmem:[%s6] sm:$0xf] %v934
    %967 = vst [vmem:[%s6 + $0x4] sm:$0xf] %v935
    %968 = vst [vmem:[%s6 + $0x8] sm:$0xf] %v936
    %969 = vst [vmem:[%s6 + $0xc] sm:$0xf] %v937
    %970 = vst [vmem:[%s6 + $0x10] sm:$0xf] %v938
    %971 = vst [vmem:[%s6 + $0x14] sm:$0xf] %v939
    %972 = vst [vmem:[%s6 + $0x18] sm:$0xf] %v940
    %973 = vst [vmem:[%s6 + $0x1c] sm:$0xf] %v941
    %974 = vst [vmem:[%s6 + $0x20] sm:$0xf] %v942
    %975 = vst [vmem:[%s6 + $0x24] sm:$0xf] %v943
    %976 = vst [vmem:[%s6 + $0x28] sm:$0xf] %v944
    %977 = vst [vmem:[%s6 + $0x2c] sm:$0xf] %v945
    %978 = vst [vmem:[%s6 + $0x30] sm:$0xf] %v946
    %979 = vst [vmem:[%s6 + $0x34] sm:$0xf] %v947
    %980 = vst [vmem:[%s6 + $0x38] sm:$0xf] %v948
    %981 = vst [vmem:[%s6 + $0x3c] sm:$0xf] %v949
  $region33: #{_gcn_forward_impl.2} parent=0 // pred_fallthru
    _
  // Predicated region
  $region34: #{_gcn_forward_impl.2} parent=0 // pred_check
    _
  $region35: #{_gcn_forward_impl.2} parent=0 // pred_check_branch
    %983 = sbr.rel (0) target = $region37
  $region36: #{_gcn_forward_impl.2} parent=0 // pred_region
    _
  $region37: #{_gcn_forward_impl.2} parent=0 // pred_fallthru
    _
  // Predicated region
  $region38: #{_gcn_forward_impl.2} parent=0 // pred_check
    _
  $region39: #{_gcn_forward_impl.2} parent=0 // pred_check_branch
    %985 = sbr.rel (0) target = $region41
  $region40: #{_gcn_forward_impl.2} parent=0 // pred_region
    _
  $region41: #{_gcn_forward_impl.2} parent=0 // pred_fallthru
    _

</llo_original>
